<compile_context>
chip_gen: v7x
topology: tpu7x:2x2x1
jax: 0.10.0
libtpu: 0.0.40
codegen_flags: <defaults>
</compile_context>

<pallas_src>
import jax
import jax.numpy as jnp
from jax.experimental import pallas as pl
from jax.experimental.pallas import tpu as pltpu


def _round_up(x, m):
    return (x + m - 1) // m * m


def _pad2d(x, rows, cols):
    r, c = x.shape
    if (r, c) == (rows, cols):
        return x
    return jnp.pad(x, ((0, rows - r), (0, cols - c)))


# --------------------------------------------------------------------------
# Fused im2col-matmul + folded-BN bias (+ residual) (+ ReLU) kernel
#   out = maybe_relu((A @ W_folded) + bias [+ residual])
#   A/W are bf16 on the MXU, accumulation and epilogue in f32.
# --------------------------------------------------------------------------
def _make_matmul_bias_kernel(relu, has_residual):
    def kernel(a_ref, b_ref, bias_ref, *rest):
        if has_residual:
            r_ref, o_ref = rest
        else:
            (o_ref,) = rest
        # Single full-K dot: K <= 576 for every conv in this network.
        y = jnp.dot(a_ref[...], b_ref[...], preferred_element_type=jnp.float32)
        # Epilogue stays in f32 vregs (v5e VPU has no bf16 ALU); cast at store.
        y = y + bias_ref[...]
        if has_residual:
            y = y + r_ref[...]
        if relu:
            y = jnp.maximum(y, 0.0)
        o_ref[...] = y.astype(o_ref.dtype)

    return kernel


def fused_matmul_bias(a, b, bias, residual=None, relu=True):
    """maybe_relu((a @ b) + bias [+ residual]); MXU inputs in bf16."""
    M, K = a.shape
    K2, N = b.shape
    assert K == K2

    Kp = _round_up(K, 16)                 # bf16 sublane packing for the weights
    Np = _round_up(N, 128)                # lane-dense output
    tm = min(_round_up(M, 16), 256)       # VMEM-bounded, M-parallel at scale
    Mp = _round_up(M, tm)
    tn = 256 if Np % 256 == 0 else 128    # always divides Np; matches 256 MXU

    a_p = _pad2d(a.astype(jnp.bfloat16), Mp, Kp)
    b_p = _pad2d(b.astype(jnp.bfloat16), Kp, Np)
    bias_p = _pad2d(bias.reshape(1, N).astype(jnp.float32), 1, Np)

    in_specs = [
        pl.BlockSpec((tm, Kp), lambda i, j: (i, 0)),
        pl.BlockSpec((Kp, tn), lambda i, j: (0, j)),
        pl.BlockSpec((1, tn), lambda i, j: (0, j)),
    ]
    inputs = [a_p, b_p, bias_p]
    has_residual = residual is not None
    if has_residual:
        in_specs.append(pl.BlockSpec((tm, tn), lambda i, j: (i, j)))
        inputs.append(_pad2d(residual.astype(jnp.float32), Mp, Np))

    out = pl.pallas_call(
        _make_matmul_bias_kernel(relu, has_residual),
        out_shape=jax.ShapeDtypeStruct((Mp, Np), jnp.float32),
        grid=(Mp // tm, Np // tn),
        in_specs=in_specs,
        out_specs=pl.BlockSpec((tm, tn), lambda i, j: (i, j)),
        compiler_params=pltpu.CompilerParams(
            dimension_semantics=("parallel", "parallel"),
            vmem_limit_bytes=32 * 1024 * 1024),
    )(*inputs)
    return out[:M, :N]


# --------------------------------------------------------------------------
# MaxPool 3x3 / stride 2 / pad 1 kernel (window-max reduction, tiled over M)
# --------------------------------------------------------------------------
def _maxpool_kernel(x_ref, o_ref):
    o_ref[...] = jnp.max(x_ref[...], axis=0)


def maxpool_3x3_s2_p1(x):
    # x: (B, H, W, C) NHWC, float32
    B, H, W, C = x.shape
    Ho = (H + 2 - 3) // 2 + 1
    Wo = (W + 2 - 3) // 2 + 1
    xp = jnp.pad(x, ((0, 0), (1, 1), (1, 1), (0, 0)),
                 constant_values=-jnp.inf)
    wins = []
    for i in range(3):
        for j in range(3):
            wins.append(xp[:, i:i + 2 * (Ho - 1) + 1:2,
                           j:j + 2 * (Wo - 1) + 1:2, :])
    wins = jnp.stack(wins, axis=0).reshape(9, B * Ho * Wo, C)

    M = B * Ho * Wo
    Cp = _round_up(C, 128)
    tm = min(_round_up(M, 8), 512)
    Mp = _round_up(M, tm)
    wins_p = jnp.pad(wins, ((0, 0), (0, Mp - M), (0, Cp - C)),
                     constant_values=-jnp.inf)

    out = pl.pallas_call(
        _maxpool_kernel,
        out_shape=jax.ShapeDtypeStruct((Mp, Cp), jnp.float32),
        grid=(Mp // tm,),
        in_specs=[pl.BlockSpec((9, tm, Cp), lambda i: (0, i, 0))],
        out_specs=pl.BlockSpec((tm, Cp), lambda i: (i, 0)),
        compiler_params=pltpu.CompilerParams(
            dimension_semantics=("parallel",),
            vmem_limit_bytes=32 * 1024 * 1024),
    )(wins_p)
    return out[:M, :C].reshape(B, Ho, Wo, C)


# --------------------------------------------------------------------------
# Conv + BN glue (im2col in plain JAX -- fused under jit; matmul in Pallas)
# --------------------------------------------------------------------------
def _im2col(x, kh, kw, stride, pad):
    B, H, W, C = x.shape
    if kh == 1 and kw == 1 and stride == 1 and pad == 0:
        # 1x1 convs (7 of the 10): no duplication at all.
        return x.reshape(B * H * W, C), (B, H, W)
    xp = jnp.pad(x, ((0, 0), (pad, pad), (pad, pad), (0, 0)))
    Ho = (H + 2 * pad - kh) // stride + 1
    Wo = (W + 2 * pad - kw) // stride + 1
    cols = []
    for i in range(kh):
        for j in range(kw):
            cols.append(xp[:, i:i + stride * (Ho - 1) + 1:stride,
                           j:j + stride * (Wo - 1) + 1:stride, :])
    patches = jnp.concatenate(cols, axis=-1)          # (B, Ho, Wo, kh*kw*C)
    return patches.reshape(B * Ho * Wo, kh * kw * C), (B, Ho, Wo)


def conv_bn(x, w, bn, stride, pad, relu=True, residual=None):
    # x: (B,H,W,Cin) NHWC ; w: (kh,kw,Cin,Cout) ; bn = (gamma, beta, mean, var)
    kh, kw, cin, cout = w.shape
    a, (B, Ho, Wo) = _im2col(x, kh, kw, stride, pad)
    gamma, beta, mean, var = bn
    scale = gamma / jnp.sqrt(var + 1e-5)
    bias = beta - mean * scale
    # Fold the BN scale into the weights (in f32, before the bf16 cast):
    # conv+BN becomes a single matmul + bias.
    b = w.reshape(kh * kw * cin, cout) * scale[None, :]
    res = None if residual is None else residual.reshape(B * Ho * Wo, cout)
    out = fused_matmul_bias(a, b, bias, residual=res, relu=relu)
    return out.reshape(B, Ho, Wo, cout)


# --------------------------------------------------------------------------
# ResNet-50 stem + layer1 (thermal_module.forward)
# --------------------------------------------------------------------------
def bottleneck(x, p):
    identity = x
    out = conv_bn(x, p['w1'], p['bn1'], stride=1, pad=0, relu=True)
    out = conv_bn(out, p['w2'], p['bn2'], stride=1, pad=1, relu=True)
    if 'wd' in p:
        identity = conv_bn(x, p['wd'], p['bnd'], stride=1, pad=0, relu=False)
    # out = relu(bn3(conv3(out)) + identity)  -- fused residual add + relu
    out = conv_bn(out, p['w3'], p['bn3'], stride=1, pad=0, relu=True,
                  residual=identity)
    return out


def thermal_forward(x_nchw, params):
    x = jnp.transpose(x_nchw, (0, 2, 3, 1))                    # NCHW -> NHWC
    x = conv_bn(x, params['conv1'], params['bn1'], stride=2, pad=3, relu=True)
    x = maxpool_3x3_s2_p1(x)
    for blk in params['layer1']:
        x = bottleneck(x, blk)
    return jnp.transpose(x, (0, 3, 1, 2))                      # NHWC -> NCHW


# --------------------------------------------------------------------------
# Deterministic synthetic parameters (shapes match resnet50 conv1/bn1/layer1)
# --------------------------------------------------------------------------
def init_params(key):
    keys = iter(jax.random.split(key, 64))

    def conv_w(shape):
        kh, kw, cin, cout = shape
        fan_in = kh * kw * cin
        return jax.random.normal(next(keys), shape, jnp.float32) * jnp.sqrt(2.0 / fan_in)

    def bn(c):
        k1, k2, k3, k4 = jax.random.split(next(keys), 4)
        return (1.0 + 0.1 * jax.random.normal(k1, (c,), jnp.float32),
                0.1 * jax.random.normal(k2, (c,), jnp.float32),
                0.1 * jax.random.normal(k3, (c,), jnp.float32),
                1.0 + 0.1 * jnp.abs(jax.random.normal(k4, (c,), jnp.float32)))

    params = {'conv1': conv_w((7, 7, 3, 64)), 'bn1': bn(64), 'layer1': []}
    inplanes = 64
    for b in range(3):
        blk = {'w1': conv_w((1, 1, inplanes, 64)), 'bn1': bn(64),
               'w2': conv_w((3, 3, 64, 64)), 'bn2': bn(64),
               'w3': conv_w((1, 1, 64, 256)), 'bn3': bn(256)}
        if b == 0:                      # downsample branch of first bottleneck
            blk['wd'] = conv_w((1, 1, inplanes, 256))
            blk['bnd'] = bn(256)
        params['layer1'].append(blk)
        inplanes = 256
    return params


# --------------------------------------------------------------------------
# Pure-JAX f32 reference (for correctness check only)
# --------------------------------------------------------------------------
def _ref_conv(x, w, stride, pad):
    return jax.lax.conv_general_dilated(
        x, w, (stride, stride), [(pad, pad), (pad, pad)],
        dimension_numbers=('NHWC', 'HWIO', 'NHWC'),
        precision=jax.lax.Precision.HIGHEST)


def _ref_bn(x, bn, relu):
    gamma, beta, mean, var = bn
    y = (x - mean) / jnp.sqrt(var + 1e-5) * gamma + beta
    return jnp.maximum(y, 0.0) if relu else y


def _ref_maxpool(x):
    return jax.lax.reduce_window(x, -jnp.inf, jax.lax.max,
                                 (1, 3, 3, 1), (1, 2, 2, 1),
                                 [(0, 0), (1, 1), (1, 1), (0, 0)])


def reference_forward(x_nchw, params):
    x = jnp.transpose(x_nchw, (0, 2, 3, 1))
    x = _ref_bn(_ref_conv(x, params['conv1'], 2, 3), params['bn1'], True)
    x = _ref_maxpool(x)
    for p in params['layer1']:
        identity = x
        out = _ref_bn(_ref_conv(x, p['w1'], 1, 0), p['bn1'], True)
        out = _ref_bn(_ref_conv(out, p['w2'], 1, 1), p['bn2'], True)
        if 'wd' in p:
            identity = _ref_bn(_ref_conv(x, p['wd'], 1, 0), p['bnd'], False)
        out = _ref_bn(_ref_conv(out, p['w3'], 1, 0), p['bn3'], False) + identity
        x = jnp.maximum(out, 0.0)
    return jnp.transpose(x, (0, 3, 1, 2))


if __name__ == "__main__":
    key = jax.random.PRNGKey(0)
    kx, kp = jax.random.split(key)
    # PyTorch-style NCHW input: batch=2, channels=3 (RGB/thermal), spatial=16
    x = jax.random.normal(kx, (2, 3, 16, 16), jnp.float32)
    params = init_params(kp)

    fwd = jax.jit(thermal_forward)
    out = jax.block_until_ready(fwd(x, params))
    assert out.shape == (2, 256, 4, 4), out.shape

    ref = jax.block_until_ready(reference_forward(x, params))
    # MXU inputs are bf16 (f32 accumulation); compare against the f32 reference
    # relative to the output scale, which absorbs bf16 rounding through the
    # 10 chained conv layers.
    max_abs_err = float(jnp.max(jnp.abs(out - ref)))
    scale = float(jnp.max(jnp.abs(ref)))
    assert jnp.all(jnp.isfinite(out)), "non-finite output"
    assert max_abs_err <= 2e-2 * scale + 2e-2, (max_abs_err, scale)

    print("KERNEL_OK")
</pallas_src>

<mosaic_0001>
module attributes {stable_mosaic.version = 11 : i64} {
  func.func @kernel(%arg0: i32, %arg1: i32, %arg2: memref<128x160xbf16, #tpu.memory_space<vmem>>, %arg3: memref<160x128xbf16, #tpu.memory_space<vmem>>, %arg4: memref<1x128xf32, #tpu.memory_space<vmem>>, %arg5: memref<128x128xf32, #tpu.memory_space<vmem>>) attributes {dimension_semantics = [#tpu.dimension_semantics<parallel>, #tpu.dimension_semantics<parallel>], iteration_bounds = array<i64: 1, 1>, scalar_prefetch = 0 : i64, scratch_operands = 0 : i64, tpu.core_type = #tpu.core_type<tc>, window_params = [{transform_indices = @transform_0, window_bounds = array<i64: 128, 160>}, {transform_indices = @transform_1, window_bounds = array<i64: 160, 128>}, {transform_indices = @transform_2, window_bounds = array<i64: 1, 128>}, {transform_indices = @transform_3, window_bounds = array<i64: 128, 128>}]} {
    %c0 = arith.constant 0 : index
    %c0_0 = arith.constant 0 : index
    %0 = vector.load %arg2[%c0, %c0_0] : memref<128x160xbf16, #tpu.memory_space<vmem>>, vector<128x160xbf16>
    %c0_1 = arith.constant 0 : index
    %c0_2 = arith.constant 0 : index
    %1 = vector.load %arg3[%c0_1, %c0_2] : memref<160x128xbf16, #tpu.memory_space<vmem>>, vector<160x128xbf16>
    %cst = arith.constant dense<0.000000e+00> : vector<128x128xf32>
    %2 = tpu.matmul %0, %1, %cst {dimension_numbers = #tpu.dot_dimension_numbers<[1], [0], [0], [1], [0, 0, 1, 1], [], []>} : vector<128x160xbf16>, vector<160x128xbf16>, vector<128x128xf32> -> vector<128x128xf32>
    %c0_3 = arith.constant 0 : index
    %c0_4 = arith.constant 0 : index
    %3 = vector.load %arg4[%c0_3, %c0_4] : memref<1x128xf32, #tpu.memory_space<vmem>>, vector<1x128xf32>
    %4 = vector.broadcast %3 : vector<1x128xf32> to vector<128x128xf32>
    %5 = arith.addf %2, %4 : vector<128x128xf32>
    %cst_5 = arith.constant 0.000000e+00 : f32
    %6 = vector.broadcast %cst_5 : f32 to vector<128x128xf32>
    %7 = arith.maximumf %5, %6 : vector<128x128xf32>
    %c0_6 = arith.constant 0 : index
    %c0_7 = arith.constant 0 : index
    %8 = vector.load %arg5[%c0_6, %c0_7] : memref<128x128xf32, #tpu.memory_space<vmem>>, vector<128x128xf32>
    tpu.vector_store %arg5[%c0_6, %c0_7], %7 {strides = array<i32>} : memref<128x128xf32, #tpu.memory_space<vmem>>, vector<128x128xf32>,
    return
  }
  func.func @transform_0(%arg0: i32, %arg1: i32) -> (i32, i32) {
    %c0_i32 = arith.constant 0 : i32
    %c0_i32_0 = arith.constant 0 : i32
    return %arg0, %c0_i32 : i32, i32
  }
  func.func @transform_1(%arg0: i32, %arg1: i32) -> (i32, i32) {
    %c0_i32 = arith.constant 0 : i32
    %c0_i32_0 = arith.constant 0 : i32
    return %c0_i32, %arg1 : i32, i32
  }
  func.func @transform_2(%arg0: i32, %arg1: i32) -> (i32, i32) {
    %c0_i32 = arith.constant 0 : i32
    %c0_i32_0 = arith.constant 0 : i32
    return %c0_i32, %arg1 : i32, i32
  }
  func.func @transform_3(%arg0: i32, %arg1: i32) -> (i32, i32) {
    %c0_i32 = arith.constant 0 : i32
    return %arg0, %arg1 : i32, i32
  }
}

module attributes {stable_mosaic.version = 11 : i64} {
  func.func @_maxpool_kernel(%arg0: i32, %arg1: memref<9x32x128xf32, #tpu.memory_space<vmem>>, %arg2: memref<32x128xf32, #tpu.memory_space<vmem>>) attributes {dimension_semantics = [#tpu.dimension_semantics<parallel>], iteration_bounds = array<i64: 1>, scalar_prefetch = 0 : i64, scratch_operands = 0 : i64, tpu.core_type = #tpu.core_type<tc>, window_params = [{transform_indices = @transform_0, window_bounds = array<i64: 9, 32, 128>}, {transform_indices = @transform_1, window_bounds = array<i64: 32, 128>}]} {
    %c0 = arith.constant 0 : index
    %c0_0 = arith.constant 0 : index
    %c0_1 = arith.constant 0 : index
    %0 = vector.load %arg1[%c0, %c0_0, %c0_1] : memref<9x32x128xf32, #tpu.memory_space<vmem>>, vector<9x32x128xf32>
    %cst = arith.constant dense<0xFF800000> : vector<32x128xf32>
    %1 = vector.multi_reduction <maximumf>, %0, %cst [0] : vector<9x32x128xf32> to vector<32x128xf32>
    %c0_2 = arith.constant 0 : index
    %c0_3 = arith.constant 0 : index
    %2 = vector.load %arg2[%c0_2, %c0_3] : memref<32x128xf32, #tpu.memory_space<vmem>>, vector<32x128xf32>
    tpu.vector_store %arg2[%c0_2, %c0_3], %1 {strides = array<i32>} : memref<32x128xf32, #tpu.memory_space<vmem>>, vector<32x128xf32>,
    return
  }
  func.func @transform_0(%arg0: i32) -> (i32, i32, i32) {
    %c0_i32 = arith.constant 0 : i32
    %c0_i32_0 = arith.constant 0 : i32
    %c0_i32_1 = arith.constant 0 : i32
    return %c0_i32, %arg0, %c0_i32_0 : i32, i32, i32
  }
  func.func @transform_1(%arg0: i32) -> (i32, i32) {
    %c0_i32 = arith.constant 0 : i32
    %c0_i32_0 = arith.constant 0 : i32
    return %arg0, %c0_i32 : i32, i32
  }
}

module attributes {stable_mosaic.version = 11 : i64} {
  func.func @kernel(%arg0: i32, %arg1: i32, %arg2: memref<32x64xbf16, #tpu.memory_space<vmem>>, %arg3: memref<64x128xbf16, #tpu.memory_space<vmem>>, %arg4: memref<1x128xf32, #tpu.memory_space<vmem>>, %arg5: memref<32x128xf32, #tpu.memory_space<vmem>>) attributes {dimension_semantics = [#tpu.dimension_semantics<parallel>, #tpu.dimension_semantics<parallel>], iteration_bounds = array<i64: 1, 1>, scalar_prefetch = 0 : i64, scratch_operands = 0 : i64, tpu.core_type = #tpu.core_type<tc>, window_params = [{transform_indices = @transform_0, window_bounds = array<i64: 32, 64>}, {transform_indices = @transform_1, window_bounds = array<i64: 64, 128>}, {transform_indices = @transform_2, window_bounds = array<i64: 1, 128>}, {transform_indices = @transform_3, window_bounds = array<i64: 32, 128>}]} {
    %c0 = arith.constant 0 : index
    %c0_0 = arith.constant 0 : index
    %0 = vector.load %arg2[%c0, %c0_0] : memref<32x64xbf16, #tpu.memory_space<vmem>>, vector<32x64xbf16>
    %c0_1 = arith.constant 0 : index
    %c0_2 = arith.constant 0 : index
    %1 = vector.load %arg3[%c0_1, %c0_2] : memref<64x128xbf16, #tpu.memory_space<vmem>>, vector<64x128xbf16>
    %cst = arith.constant dense<0.000000e+00> : vector<32x128xf32>
    %2 = tpu.matmul %0, %1, %cst {dimension_numbers = #tpu.dot_dimension_numbers<[1], [0], [0], [1], [0, 0, 1, 1], [], []>} : vector<32x64xbf16>, vector<64x128xbf16>, vector<32x128xf32> -> vector<32x128xf32>
    %c0_3 = arith.constant 0 : index
    %c0_4 = arith.constant 0 : index
    %3 = vector.load %arg4[%c0_3, %c0_4] : memref<1x128xf32, #tpu.memory_space<vmem>>, vector<1x128xf32>
    %4 = vector.broadcast %3 : vector<1x128xf32> to vector<32x128xf32>
    %5 = arith.addf %2, %4 : vector<32x128xf32>
    %cst_5 = arith.constant 0.000000e+00 : f32
    %6 = vector.broadcast %cst_5 : f32 to vector<32x128xf32>
    %7 = arith.maximumf %5, %6 : vector<32x128xf32>
    %c0_6 = arith.constant 0 : index
    %c0_7 = arith.constant 0 : index
    %8 = vector.load %arg5[%c0_6, %c0_7] : memref<32x128xf32, #tpu.memory_space<vmem>>, vector<32x128xf32>
    tpu.vector_store %arg5[%c0_6, %c0_7], %7 {strides = array<i32>} : memref<32x128xf32, #tpu.memory_space<vmem>>, vector<32x128xf32>,
    return
  }
  func.func @transform_0(%arg0: i32, %arg1: i32) -> (i32, i32) {
    %c0_i32 = arith.constant 0 : i32
    %c0_i32_0 = arith.constant 0 : i32
    return %arg0, %c0_i32 : i32, i32
  }
  func.func @transform_1(%arg0: i32, %arg1: i32) -> (i32, i32) {
    %c0_i32 = arith.constant 0 : i32
    %c0_i32_0 = arith.constant 0 : i32
    return %c0_i32, %arg1 : i32, i32
  }
  func.func @transform_2(%arg0: i32, %arg1: i32) -> (i32, i32) {
    %c0_i32 = arith.constant 0 : i32
    %c0_i32_0 = arith.constant 0 : i32
    return %c0_i32, %arg1 : i32, i32
  }
  func.func @transform_3(%arg0: i32, %arg1: i32) -> (i32, i32) {
    %c0_i32 = arith.constant 0 : i32
    return %arg0, %arg1 : i32, i32
  }
}

module attributes {stable_mosaic.version = 11 : i64} {
  func.func @kernel(%arg0: i32, %arg1: i32, %arg2: memref<32x576xbf16, #tpu.memory_space<vmem>>, %arg3: memref<576x128xbf16, #tpu.memory_space<vmem>>, %arg4: memref<1x128xf32, #tpu.memory_space<vmem>>, %arg5: memref<32x128xf32, #tpu.memory_space<vmem>>) attributes {dimension_semantics = [#tpu.dimension_semantics<parallel>, #tpu.dimension_semantics<parallel>], iteration_bounds = array<i64: 1, 1>, scalar_prefetch = 0 : i64, scratch_operands = 0 : i64, tpu.core_type = #tpu.core_type<tc>, window_params = [{transform_indices = @transform_0, window_bounds = array<i64: 32, 576>}, {transform_indices = @transform_1, window_bounds = array<i64: 576, 128>}, {transform_indices = @transform_2, window_bounds = array<i64: 1, 128>}, {transform_indices = @transform_3, window_bounds = array<i64: 32, 128>}]} {
    %c0 = arith.constant 0 : index
    %c0_0 = arith.constant 0 : index
    %0 = vector.load %arg2[%c0, %c0_0] : memref<32x576xbf16, #tpu.memory_space<vmem>>, vector<32x576xbf16>
    %c0_1 = arith.constant 0 : index
    %c0_2 = arith.constant 0 : index
    %1 = vector.load %arg3[%c0_1, %c0_2] : memref<576x128xbf16, #tpu.memory_space<vmem>>, vector<576x128xbf16>
    %cst = arith.constant dense<0.000000e+00> : vector<32x128xf32>
    %2 = tpu.matmul %0, %1, %cst {dimension_numbers = #tpu.dot_dimension_numbers<[1], [0], [0], [1], [0, 0, 1, 1], [], []>} : vector<32x576xbf16>, vector<576x128xbf16>, vector<32x128xf32> -> vector<32x128xf32>
    %c0_3 = arith.constant 0 : index
    %c0_4 = arith.constant 0 : index
    %3 = vector.load %arg4[%c0_3, %c0_4] : memref<1x128xf32, #tpu.memory_space<vmem>>, vector<1x128xf32>
    %4 = vector.broadcast %3 : vector<1x128xf32> to vector<32x128xf32>
    %5 = arith.addf %2, %4 : vector<32x128xf32>
    %cst_5 = arith.constant 0.000000e+00 : f32
    %6 = vector.broadcast %cst_5 : f32 to vector<32x128xf32>
    %7 = arith.maximumf %5, %6 : vector<32x128xf32>
    %c0_6 = arith.constant 0 : index
    %c0_7 = arith.constant 0 : index
    %8 = vector.load %arg5[%c0_6, %c0_7] : memref<32x128xf32, #tpu.memory_space<vmem>>, vector<32x128xf32>
    tpu.vector_store %arg5[%c0_6, %c0_7], %7 {strides = array<i32>} : memref<32x128xf32, #tpu.memory_space<vmem>>, vector<32x128xf32>,
    return
  }
  func.func @transform_0(%arg0: i32, %arg1: i32) -> (i32, i32) {
    %c0_i32 = arith.constant 0 : i32
    %c0_i32_0 = arith.constant 0 : i32
    return %arg0, %c0_i32 : i32, i32
  }
  func.func @transform_1(%arg0: i32, %arg1: i32) -> (i32, i32) {
    %c0_i32 = arith.constant 0 : i32
    %c0_i32_0 = arith.constant 0 : i32
    return %c0_i32, %arg1 : i32, i32
  }
  func.func @transform_2(%arg0: i32, %arg1: i32) -> (i32, i32) {
    %c0_i32 = arith.constant 0 : i32
    %c0_i32_0 = arith.constant 0 : i32
    return %c0_i32, %arg1 : i32, i32
  }
  func.func @transform_3(%arg0: i32, %arg1: i32) -> (i32, i32) {
    %c0_i32 = arith.constant 0 : i32
    return %arg0, %arg1 : i32, i32
  }
}

module attributes {stable_mosaic.version = 11 : i64} {
  func.func @kernel(%arg0: i32, %arg1: i32, %arg2: memref<32x64xbf16, #tpu.memory_space<vmem>>, %arg3: memref<64x256xbf16, #tpu.memory_space<vmem>>, %arg4: memref<1x256xf32, #tpu.memory_space<vmem>>, %arg5: memref<32x256xf32, #tpu.memory_space<vmem>>) attributes {dimension_semantics = [#tpu.dimension_semantics<parallel>, #tpu.dimension_semantics<parallel>], iteration_bounds = array<i64: 1, 1>, scalar_prefetch = 0 : i64, scratch_operands = 0 : i64, tpu.core_type = #tpu.core_type<tc>, window_params = [{transform_indices = @transform_0, window_bounds = array<i64: 32, 64>}, {transform_indices = @transform_1, window_bounds = array<i64: 64, 256>}, {transform_indices = @transform_2, window_bounds = array<i64: 1, 256>}, {transform_indices = @transform_3, window_bounds = array<i64: 32, 256>}]} {
    %c0 = arith.constant 0 : index
    %c0_0 = arith.constant 0 : index
    %0 = vector.load %arg2[%c0, %c0_0] : memref<32x64xbf16, #tpu.memory_space<vmem>>, vector<32x64xbf16>
    %c0_1 = arith.constant 0 : index
    %c0_2 = arith.constant 0 : index
    %1 = vector.load %arg3[%c0_1, %c0_2] : memref<64x256xbf16, #tpu.memory_space<vmem>>, vector<64x256xbf16>
    %cst = arith.constant dense<0.000000e+00> : vector<32x256xf32>
    %2 = tpu.matmul %0, %1, %cst {dimension_numbers = #tpu.dot_dimension_numbers<[1], [0], [0], [1], [0, 0, 1, 1], [], []>} : vector<32x64xbf16>, vector<64x256xbf16>, vector<32x256xf32> -> vector<32x256xf32>
    %c0_3 = arith.constant 0 : index
    %c0_4 = arith.constant 0 : index
    %3 = vector.load %arg4[%c0_3, %c0_4] : memref<1x256xf32, #tpu.memory_space<vmem>>, vector<1x256xf32>
    %4 = vector.broadcast %3 : vector<1x256xf32> to vector<32x256xf32>
    %5 = arith.addf %2, %4 : vector<32x256xf32>
    %c0_5 = arith.constant 0 : index
    %c0_6 = arith.constant 0 : index
    %6 = vector.load %arg5[%c0_5, %c0_6] : memref<32x256xf32, #tpu.memory_space<vmem>>, vector<32x256xf32>
    tpu.vector_store %arg5[%c0_5, %c0_6], %5 {strides = array<i32>} : memref<32x256xf32, #tpu.memory_space<vmem>>, vector<32x256xf32>,
    return
  }
  func.func @transform_0(%arg0: i32, %arg1: i32) -> (i32, i32) {
    %c0_i32 = arith.constant 0 : i32
    %c0_i32_0 = arith.constant 0 : i32
    return %arg0, %c0_i32 : i32, i32
  }
  func.func @transform_1(%arg0: i32, %arg1: i32) -> (i32, i32) {
    %c0_i32 = arith.constant 0 : i32
    %c0_i32_0 = arith.constant 0 : i32
    return %c0_i32, %arg1 : i32, i32
  }
  func.func @transform_2(%arg0: i32, %arg1: i32) -> (i32, i32) {
    %c0_i32 = arith.constant 0 : i32
    %c0_i32_0 = arith.constant 0 : i32
    return %c0_i32, %arg1 : i32, i32
  }
  func.func @transform_3(%arg0: i32, %arg1: i32) -> (i32, i32) {
    %c0_i32 = arith.constant 0 : i32
    return %arg0, %arg1 : i32, i32
  }
}

module attributes {stable_mosaic.version = 11 : i64} {
  func.func @kernel(%arg0: i32, %arg1: i32, %arg2: memref<32x64xbf16, #tpu.memory_space<vmem>>, %arg3: memref<64x256xbf16, #tpu.memory_space<vmem>>, %arg4: memref<1x256xf32, #tpu.memory_space<vmem>>, %arg5: memref<32x256xf32, #tpu.memory_space<vmem>>, %arg6: memref<32x256xf32, #tpu.memory_space<vmem>>) attributes {dimension_semantics = [#tpu.dimension_semantics<parallel>, #tpu.dimension_semantics<parallel>], iteration_bounds = array<i64: 1, 1>, scalar_prefetch = 0 : i64, scratch_operands = 0 : i64, tpu.core_type = #tpu.core_type<tc>, window_params = [{transform_indices = @transform_0, window_bounds = array<i64: 32, 64>}, {transform_indices = @transform_1, window_bounds = array<i64: 64, 256>}, {transform_indices = @transform_2, window_bounds = array<i64: 1, 256>}, {transform_indices = @transform_3, window_bounds = array<i64: 32, 256>}, {transform_indices = @transform_4, window_bounds = array<i64: 32, 256>}]} {
    %c0 = arith.constant 0 : index
    %c0_0 = arith.constant 0 : index
    %0 = vector.load %arg2[%c0, %c0_0] : memref<32x64xbf16, #tpu.memory_space<vmem>>, vector<32x64xbf16>
    %c0_1 = arith.constant 0 : index
    %c0_2 = arith.constant 0 : index
    %1 = vector.load %arg3[%c0_1, %c0_2] : memref<64x256xbf16, #tpu.memory_space<vmem>>, vector<64x256xbf16>
    %cst = arith.constant dense<0.000000e+00> : vector<32x256xf32>
    %2 = tpu.matmul %0, %1, %cst {dimension_numbers = #tpu.dot_dimension_numbers<[1], [0], [0], [1], [0, 0, 1, 1], [], []>} : vector<32x64xbf16>, vector<64x256xbf16>, vector<32x256xf32> -> vector<32x256xf32>
    %c0_3 = arith.constant 0 : index
    %c0_4 = arith.constant 0 : index
    %3 = vector.load %arg4[%c0_3, %c0_4] : memref<1x256xf32, #tpu.memory_space<vmem>>, vector<1x256xf32>
    %4 = vector.broadcast %3 : vector<1x256xf32> to vector<32x256xf32>
    %5 = arith.addf %2, %4 : vector<32x256xf32>
    %c0_5 = arith.constant 0 : index
    %c0_6 = arith.constant 0 : index
    %6 = vector.load %arg5[%c0_5, %c0_6] : memref<32x256xf32, #tpu.memory_space<vmem>>, vector<32x256xf32>
    %7 = arith.addf %5, %6 : vector<32x256xf32>
    %cst_7 = arith.constant 0.000000e+00 : f32
    %8 = vector.broadcast %cst_7 : f32 to vector<32x256xf32>
    %9 = arith.maximumf %7, %8 : vector<32x256xf32>
    %c0_8 = arith.constant 0 : index
    %c0_9 = arith.constant 0 : index
    %10 = vector.load %arg6[%c0_8, %c0_9] : memref<32x256xf32, #tpu.memory_space<vmem>>, vector<32x256xf32>
    tpu.vector_store %arg6[%c0_8, %c0_9], %9 {strides = array<i32>} : memref<32x256xf32, #tpu.memory_space<vmem>>, vector<32x256xf32>,
    return
  }
  func.func @transform_0(%arg0: i32, %arg1: i32) -> (i32, i32) {
    %c0_i32 = arith.constant 0 : i32
    %c0_i32_0 = arith.constant 0 : i32
    return %arg0, %c0_i32 : i32, i32
  }
  func.func @transform_1(%arg0: i32, %arg1: i32) -> (i32, i32) {
    %c0_i32 = arith.constant 0 : i32
    %c0_i32_0 = arith.constant 0 : i32
    return %c0_i32, %arg1 : i32, i32
  }
  func.func @transform_2(%arg0: i32, %arg1: i32) -> (i32, i32) {
    %c0_i32 = arith.constant 0 : i32
    %c0_i32_0 = arith.constant 0 : i32
    return %c0_i32, %arg1 : i32, i32
  }
  func.func @transform_3(%arg0: i32, %arg1: i32) -> (i32, i32) {
    %c0_i32 = arith.constant 0 : i32
    return %arg0, %arg1 : i32, i32
  }
  func.func @transform_4(%arg0: i32, %arg1: i32) -> (i32, i32) {
    %c0_i32 = arith.constant 0 : i32
    return %arg0, %arg1 : i32, i32
  }
}

module attributes {stable_mosaic.version = 11 : i64} {
  func.func @kernel(%arg0: i32, %arg1: i32, %arg2: memref<32x256xbf16, #tpu.memory_space<vmem>>, %arg3: memref<256x128xbf16, #tpu.memory_space<vmem>>, %arg4: memref<1x128xf32, #tpu.memory_space<vmem>>, %arg5: memref<32x128xf32, #tpu.memory_space<vmem>>) attributes {dimension_semantics = [#tpu.dimension_semantics<parallel>, #tpu.dimension_semantics<parallel>], iteration_bounds = array<i64: 1, 1>, scalar_prefetch = 0 : i64, scratch_operands = 0 : i64, tpu.core_type = #tpu.core_type<tc>, window_params = [{transform_indices = @transform_0, window_bounds = array<i64: 32, 256>}, {transform_indices = @transform_1, window_bounds = array<i64: 256, 128>}, {transform_indices = @transform_2, window_bounds = array<i64: 1, 128>}, {transform_indices = @transform_3, window_bounds = array<i64: 32, 128>}]} {
    %c0 = arith.constant 0 : index
    %c0_0 = arith.constant 0 : index
    %0 = vector.load %arg2[%c0, %c0_0] : memref<32x256xbf16, #tpu.memory_space<vmem>>, vector<32x256xbf16>
    %c0_1 = arith.constant 0 : index
    %c0_2 = arith.constant 0 : index
    %1 = vector.load %arg3[%c0_1, %c0_2] : memref<256x128xbf16, #tpu.memory_space<vmem>>, vector<256x128xbf16>
    %cst = arith.constant dense<0.000000e+00> : vector<32x128xf32>
    %2 = tpu.matmul %0, %1, %cst {dimension_numbers = #tpu.dot_dimension_numbers<[1], [0], [0], [1], [0, 0, 1, 1], [], []>} : vector<32x256xbf16>, vector<256x128xbf16>, vector<32x128xf32> -> vector<32x128xf32>
    %c0_3 = arith.constant 0 : index
    %c0_4 = arith.constant 0 : index
    %3 = vector.load %arg4[%c0_3, %c0_4] : memref<1x128xf32, #tpu.memory_space<vmem>>, vector<1x128xf32>
    %4 = vector.broadcast %3 : vector<1x128xf32> to vector<32x128xf32>
    %5 = arith.addf %2, %4 : vector<32x128xf32>
    %cst_5 = arith.constant 0.000000e+00 : f32
    %6 = vector.broadcast %cst_5 : f32 to vector<32x128xf32>
    %7 = arith.maximumf %5, %6 : vector<32x128xf32>
    %c0_6 = arith.constant 0 : index
    %c0_7 = arith.constant 0 : index
    %8 = vector.load %arg5[%c0_6, %c0_7] : memref<32x128xf32, #tpu.memory_space<vmem>>, vector<32x128xf32>
    tpu.vector_store %arg5[%c0_6, %c0_7], %7 {strides = array<i32>} : memref<32x128xf32, #tpu.memory_space<vmem>>, vector<32x128xf32>,
    return
  }
  func.func @transform_0(%arg0: i32, %arg1: i32) -> (i32, i32) {
    %c0_i32 = arith.constant 0 : i32
    %c0_i32_0 = arith.constant 0 : i32
    return %arg0, %c0_i32 : i32, i32
  }
  func.func @transform_1(%arg0: i32, %arg1: i32) -> (i32, i32) {
    %c0_i32 = arith.constant 0 : i32
    %c0_i32_0 = arith.constant 0 : i32
    return %c0_i32, %arg1 : i32, i32
  }
  func.func @transform_2(%arg0: i32, %arg1: i32) -> (i32, i32) {
    %c0_i32 = arith.constant 0 : i32
    %c0_i32_0 = arith.constant 0 : i32
    return %c0_i32, %arg1 : i32, i32
  }
  func.func @transform_3(%arg0: i32, %arg1: i32) -> (i32, i32) {
    %c0_i32 = arith.constant 0 : i32
    return %arg0, %arg1 : i32, i32
  }
}

</mosaic_0001>

<llo_original>
// kernel: thermal_forward.13
$region0: #{thermal_forward.13}
  #allocation0 [shape = 'u32[]', space=smem, size = 0x4, offset = 0x4, fixed_abs, tag = 'smem constant byte address 0x4 - core index']
  #allocation1 [shape = 'u32[144,128]{1,0:T(1,128)}', space=vmem, size = 0x12000, scoped, tag = 'internal scratch']
  %s0 = inlined_call_operand.vmem [shape: f32[9,32,128], index: 0, kind: input, shape index: {}]
  %s1 = inlined_call_operand.vmem [shape: f32[32,128], index: 1, kind: output, shape index: {}]
  %s2 = sld [smem:[#allocation0]]
  $region14: #{thermal_forward.13} parent=0
    _
  %s4 = ssub.s32 1, %s2
  %s5 = scalar_select 0, %s4, %s2
  // Predicated region
  $region2: #{thermal_forward.13} parent=0 // pred_check
    _
  $region3: #{thermal_forward.13} parent=0 // pred_check_branch
    %7 = sbr.rel (0) target = $region5
  $region4: #{thermal_forward.13} parent=0 // pred_region
    _
  $region5: #{thermal_forward.13} parent=0 // pred_fallthru
    _
  %v8 = vld [vmem:[%s0] sm:$0xff]
  %v9 = vld [vmem:[%s0 + $0x8] sm:$0xff]
  %v10 = vld [vmem:[%s0 + $0x10] sm:$0xff]
  %v11 = vld [vmem:[%s0 + $0x18] sm:$0xff]
  %v12 = vld [vmem:[%s0 + $0x20] sm:$0xff]
  %v13 = vld [vmem:[%s0 + $0x28] sm:$0xff]
  %v14 = vld [vmem:[%s0 + $0x30] sm:$0xff]
  %v15 = vld [vmem:[%s0 + $0x38] sm:$0xff]
  %v16 = vld [vmem:[%s0 + $0x40] sm:$0xff]
  %v17 = vld [vmem:[%s0 + $0x48] sm:$0xff]
  %v18 = vld [vmem:[%s0 + $0x50] sm:$0xff]
  %v19 = vld [vmem:[%s0 + $0x58] sm:$0xff]
  %v20 = vld [vmem:[%s0 + $0x60] sm:$0xff]
  %v21 = vld [vmem:[%s0 + $0x68] sm:$0xff]
  %v22 = vld [vmem:[%s0 + $0x70] sm:$0xff]
  %v23 = vld [vmem:[%s0 + $0x78] sm:$0xff]
  %v24 = vld [vmem:[%s0 + $0x80] sm:$0xff]
  %v25 = vld [vmem:[%s0 + $0x88] sm:$0xff]
  %v26 = vld [vmem:[%s0 + $0x90] sm:$0xff]
  %v27 = vld [vmem:[%s0 + $0x98] sm:$0xff]
  %v28 = vld [vmem:[%s0 + $0xa0] sm:$0xff]
  %v29 = vld [vmem:[%s0 + $0xa8] sm:$0xff]
  %v30 = vld [vmem:[%s0 + $0xb0] sm:$0xff]
  %v31 = vld [vmem:[%s0 + $0xb8] sm:$0xff]
  %v32 = vld [vmem:[%s0 + $0xc0] sm:$0xff]
  %v33 = vld [vmem:[%s0 + $0xc8] sm:$0xff]
  %v34 = vld [vmem:[%s0 + $0xd0] sm:$0xff]
  %v35 = vld [vmem:[%s0 + $0xd8] sm:$0xff]
  %v36 = vld [vmem:[%s0 + $0xe0] sm:$0xff]
  %v37 = vld [vmem:[%s0 + $0xe8] sm:$0xff]
  %v38 = vld [vmem:[%s0 + $0xf0] sm:$0xff]
  %v39 = vld [vmem:[%s0 + $0xf8] sm:$0xff]
  %v40 = vld [vmem:[%s0 + $0x100] sm:$0xff]
  %v41 = vld [vmem:[%s0 + $0x108] sm:$0xff]
  %v42 = vld [vmem:[%s0 + $0x110] sm:$0xff]
  %v43 = vld [vmem:[%s0 + $0x118] sm:$0xff]
  %v44 = vmax.f32 %v8, %v12
  %v45 = vmax.f32 %v44, %v16
  %v46 = vmax.f32 %v45, %v20
  %v47 = vmax.f32 %v46, %v24
  %v48 = vmax.f32 %v47, %v28
  %v49 = vmax.f32 %v48, %v32
  %v50 = vmax.f32 %v49, %v36
  %v51 = vmax.f32 %v50, %v40
  %v52 = vmax.f32 %v9, %v13
  %v53 = vmax.f32 %v52, %v17
  %v54 = vmax.f32 %v53, %v21
  %v55 = vmax.f32 %v54, %v25
  %v56 = vmax.f32 %v55, %v29
  %v57 = vmax.f32 %v56, %v33
  %v58 = vmax.f32 %v57, %v37
  %v59 = vmax.f32 %v58, %v41
  %v60 = vmax.f32 %v10, %v14
  %v61 = vmax.f32 %v60, %v18
  %v62 = vmax.f32 %v61, %v22
  %v63 = vmax.f32 %v62, %v26
  %v64 = vmax.f32 %v63, %v30
  %v65 = vmax.f32 %v64, %v34
  %v66 = vmax.f32 %v65, %v38
  %v67 = vmax.f32 %v66, %v42
  %v68 = vmax.f32 %v11, %v15
  %v69 = vmax.f32 %v68, %v19
  %v70 = vmax.f32 %v69, %v23
  %v71 = vmax.f32 %v70, %v27
  %v72 = vmax.f32 %v71, %v31
  %v73 = vmax.f32 %v72, %v35
  %v74 = vmax.f32 %v73, %v39
  %v75 = vmax.f32 %v74, %v43
  %76 = vst [vmem:[%s1] sm:$0xff] %v51
  %77 = vst [vmem:[%s1 + $0x8] sm:$0xff] %v59
  %78 = vst [vmem:[%s1 + $0x10] sm:$0xff] %v67
  %79 = vst [vmem:[%s1 + $0x18] sm:$0xff] %v75
  // Predicated region
  $region6: #{thermal_forward.13} parent=0 // pred_check
    _
  $region7: #{thermal_forward.13} parent=0 // pred_check_branch
    %81 = sbr.rel (0) target = $region9
  $region8: #{thermal_forward.13} parent=0 // pred_region
    _
  $region9: #{thermal_forward.13} parent=0 // pred_fallthru
    _
  // Predicated region
  $region10: #{thermal_forward.13} parent=0 // pred_check
    _
  $region11: #{thermal_forward.13} parent=0 // pred_check_branch
    %83 = sbr.rel (0) target = $region13
  $region12: #{thermal_forward.13} parent=0 // pred_region
    _
  $region13: #{thermal_forward.13} parent=0 // pred_fallthru
    _

// kernel: thermal_forward.14
$region0: #{thermal_forward.14}
  #allocation0 [shape = 'u32[]', space=smem, size = 0x4, offset = 0x4, fixed_abs, tag = 'smem constant byte address 0x4 - core index']
  #allocation1 [shape = 'u32[144,128]{1,0:T(1,128)}', space=vmem, size = 0x12000, scoped, tag = 'internal scratch']
  %s0 = inlined_call_operand.vmem [shape: bf16[32,64], index: 0, kind: input, shape index: {}]
  %s1 = inlined_call_operand.vmem [shape: bf16[64,128], index: 1, kind: input, shape index: {}]
  %s2 = inlined_call_operand.vmem [shape: f32[1,128], index: 2, kind: input, shape index: {}]
  %s3 = inlined_call_operand.vmem [shape: f32[32,128], index: 3, kind: output, shape index: {}]
  %s4 = sld [smem:[#allocation0]]
  $region22: #{thermal_forward.14} parent=0
    _
  %s6 = ssub.s32 1, %s4
  %s7 = scalar_select 0, %s6, %s4
  // Predicated region
  $region2: #{thermal_forward.14} parent=0 // pred_check
    _
  $region3: #{thermal_forward.14} parent=0 // pred_check_branch
    %9 = sbr.rel (0) target = $region5
  $region4: #{thermal_forward.14} parent=0 // pred_region
    _
  $region5: #{thermal_forward.14} parent=0 // pred_fallthru
    _
  // Predicated region
  $region6: #{thermal_forward.14} parent=0 // pred_check
    _
  $region7: #{thermal_forward.14} parent=0 // pred_check_branch
    %11 = sbr.rel (0) target = $region9
  $region8: #{thermal_forward.14} parent=0 // pred_region
    _
  $region9: #{thermal_forward.14} parent=0 // pred_fallthru
    _
  // Predicated region
  $region10: #{thermal_forward.14} parent=0 // pred_check
    _
  $region11: #{thermal_forward.14} parent=0 // pred_check_branch
    %13 = sbr.rel (0) target = $region13
  $region12: #{thermal_forward.14} parent=0 // pred_region
    _
  $region13: #{thermal_forward.14} parent=0 // pred_fallthru
    _
  %v15 = vld [vmem:[%s0] sm:$0xf]
  %v16 = vld [vmem:[%s0 + $0x4] sm:$0xf]
  %v17 = vld [vmem:[%s0 + $0x8] sm:$0xf]
  %v18 = vld [vmem:[%s0 + $0xc] sm:$0xf]
  %v19 = vld [vmem:[%s1] sm:$0xf]
  %v20 = vld [vmem:[%s1 + $0x4] sm:$0xf]
  %v21 = vld [vmem:[%s1 + $0x8] sm:$0xf]
  %v22 = vld [vmem:[%s1 + $0xc] sm:$0xf]
  %v23 = vld [vmem:[%s1 + $0x10] sm:$0xf]
  %v24 = vld [vmem:[%s1 + $0x14] sm:$0xf]
  %v25 = vld [vmem:[%s1 + $0x18] sm:$0xf]
  %v26 = vld [vmem:[%s1 + $0x1c] sm:$0xf]
  %v27 = vld [vmem:[%s2] sm:$0x1]
  %v29 = vlaneseq
  %v30 = vshrl.u32 %v29, 7
  %v31 = vsub.s32 0, %v30
  %v32 = vrot.slane %v27, %v31
  %v38 = vunpack.c.l.b16 %v15
  %v39 = vunpack.c.l.b16 %v16
  %v40 = vunpack.c.l.b16 %v17
  %v41 = vunpack.c.l.b16 %v18
  %v42 = vpack.c.b16 %v39, %v38
  %v43 = vpack.c.b16 %v41, %v40
  %v52 = vunpack.c.l.b16 %v19
  %v53 = vunpack.c.l.b16 %v20
  %v54 = vunpack.c.l.b16 %v21
  %v55 = vunpack.c.l.b16 %v22
  %v56 = vunpack.c.l.b16 %v23
  %v57 = vunpack.c.l.b16 %v24
  %v58 = vunpack.c.l.b16 %v25
  %v59 = vunpack.c.l.b16 %v26
  %v60 = vpack.c.b16 %v53, %v52
  %v61 = vpack.c.b16 %v55, %v54
  %v62 = vpack.c.b16 %v57, %v56
  %v63 = vpack.c.b16 %v59, %v58
  %vm68 = vcmask 523264
  %v70 = vsel %vm68, %v42, 0
  %v73 = vsel %vm68, %v43, 0
  %75 = vmatprep.subr.bf16.mxu0 0
  %76 = vmatpush1.bf16.msra.mxu0 %v60
  %77 = vmatprep.subr.bf16.mxu0 0
  %78 = vmatpush1.bf16.msra.mxu0 %v61
  %79 = vmatprep.subr.bf16.mxu0 0
  %80 = vmatpush1.bf16.msra.mxu0 %v62
  %81 = vmatprep.subr.bf16.mxu0 0
  %82 = vmatpush1.bf16.msra.mxu0 %v63
  %83 = vmatprep.subr.bf16.mxu0 0
  %84 = vmatpush1.bf16.msra.mxu0 0
  %85 = vmatprep.subr.bf16.mxu0 0
  %86 = vmatpush1.bf16.msra.mxu0 0
  %87 = vmatprep.subr.bf16.mxu0 0
  %88 = vmatpush1.bf16.msra.mxu0 0
  %89 = vmatprep.subr.bf16.mxu0 0
  %90 = vmatpush1.bf16.msra.mxu0 0
  %91 = vmatprep.subr.bf16.mxu0 0
  %92 = vmatpush1.bf16.msra.mxu0 0
  %93 = vmatprep.subr.bf16.mxu0 0
  %94 = vmatpush1.bf16.msra.mxu0 0
  %95 = vmatprep.subr.bf16.mxu0 0
  %96 = vmatpush1.bf16.msra.mxu0 0
  %97 = vmatprep.subr.bf16.mxu0 0
  %98 = vmatpush1.bf16.msra.mxu0 0
  %99 = vmatprep.subr.bf16.mxu0 0
  %100 = vmatpush1.bf16.msra.mxu0 0
  %101 = vmatprep.subr.bf16.mxu0 0
  %102 = vmatpush1.bf16.msra.mxu0 0
  %103 = vmatprep.subr.bf16.mxu0 0
  %104 = vmatpush1.bf16.msra.mxu0 0
  %105 = vmatprep.subr.bf16.mxu0 0
  %106 = vmatpush1.bf16.msra.mxu0 0
  %107 = vmatprep.mubr.bf16.mxu0 0
  %108 = vmatmul.mubr.bf16.gmra.mrb[0].mxu0 %v70
  %v109 = vpop.f32.mrb[0].mxu0
  %v110 = vadd.f32 %v32, %v109
  %v111 = vpop.f32.mrb[0].mxu0
  %v112 = vpop.f32.mrb[0].mxu0
  %v113 = vadd.f32 %v32, %v112
  %v114 = vpop.f32.mrb[0].mxu0
  %115 = vmatprep.mubr.bf16.mxu0 0
  %116 = vmatmul.mubr.bf16.gmra.mrb[0].mxu0 %v73
  %v117 = vpop.f32.mrb[0].mxu0
  %v118 = vadd.f32 %v32, %v117
  %v119 = vpop.f32.mrb[0].mxu0
  %v120 = vpop.f32.mrb[0].mxu0
  %v121 = vadd.f32 %v32, %v120
  %v122 = vpop.f32.mrb[0].mxu0
  %123 = vdwg.mxu0
  %v124 = vmax.f32 %v110, 0.0
  %v125 = vmax.f32 %v113, 0.0
  %v126 = vmax.f32 %v118, 0.0
  %v127 = vmax.f32 %v121, 0.0
  %128 = vst [vmem:[%s3] sm:$0xff] %v124
  %129 = vst [vmem:[%s3 + $0x8] sm:$0xff] %v125
  %130 = vst [vmem:[%s3 + $0x10] sm:$0xff] %v126
  %131 = vst [vmem:[%s3 + $0x18] sm:$0xff] %v127
  // Predicated region
  $region14: #{thermal_forward.14} parent=0 // pred_check
    _
  $region15: #{thermal_forward.14} parent=0 // pred_check_branch
    %133 = sbr.rel (0) target = $region17
  $region16: #{thermal_forward.14} parent=0 // pred_region
    _
  $region17: #{thermal_forward.14} parent=0 // pred_fallthru
    _
  // Predicated region
  $region18: #{thermal_forward.14} parent=0 // pred_check
    _
  $region19: #{thermal_forward.14} parent=0 // pred_check_branch
    %135 = sbr.rel (0) target = $region21
  $region20: #{thermal_forward.14} parent=0 // pred_region
    _
  $region21: #{thermal_forward.14} parent=0 // pred_fallthru
    _

// kernel: thermal_forward.12
$region0: #{thermal_forward.12}
  #allocation0 [shape = 'u32[]', space=smem, size = 0x4, offset = 0x4, fixed_abs, tag = 'smem constant byte address 0x4 - core index']
  #allocation1 [shape = 'u32[144,128]{1,0:T(1,128)}', space=vmem, size = 0x12000, scoped, tag = 'internal scratch']
  %s0 = inlined_call_operand.vmem [shape: bf16[128,160], index: 0, kind: input, shape index: {}]
  %s1 = inlined_call_operand.vmem [shape: bf16[160,128], index: 1, kind: input, shape index: {}]
  %s2 = inlined_call_operand.vmem [shape: f32[1,128], index: 2, kind: input, shape index: {}]
  %s3 = inlined_call_operand.vmem [shape: f32[128,128], index: 3, kind: output, shape index: {}]
  %s4 = sld [smem:[#allocation0]]
  $region22: #{thermal_forward.12} parent=0
    _
  %s6 = ssub.s32 1, %s4
  %s7 = scalar_select 0, %s6, %s4
  // Predicated region
  $region2: #{thermal_forward.12} parent=0 // pred_check
    _
  $region3: #{thermal_forward.12} parent=0 // pred_check_branch
    %9 = sbr.rel (0) target = $region5
  $region4: #{thermal_forward.12} parent=0 // pred_region
    _
  $region5: #{thermal_forward.12} parent=0 // pred_fallthru
    _
  // Predicated region
  $region6: #{thermal_forward.12} parent=0 // pred_check
    _
  $region7: #{thermal_forward.12} parent=0 // pred_check_branch
    %11 = sbr.rel (0) target = $region9
  $region8: #{thermal_forward.12} parent=0 // pred_region
    _
  $region9: #{thermal_forward.12} parent=0 // pred_fallthru
    _
  // Predicated region
  $region10: #{thermal_forward.12} parent=0 // pred_check
    _
  $region11: #{thermal_forward.12} parent=0 // pred_check_branch
    %13 = sbr.rel (0) target = $region13
  $region12: #{thermal_forward.12} parent=0 // pred_region
    _
  $region13: #{thermal_forward.12} parent=0 // pred_fallthru
    _
  %v15 = vld [vmem:[%s0] sm:$0xff]
  %v16 = vld [vmem:[%s0 + $0x8] sm:$0xff]
  %v17 = vld [vmem:[%s0 + $0x10] sm:$0xff]
  %v18 = vld [vmem:[%s0 + $0x18] sm:$0xff]
  %v19 = vld [vmem:[%s0 + $0x20] sm:$0xff]
  %v20 = vld [vmem:[%s0 + $0x28] sm:$0xff]
  %v21 = vld [vmem:[%s0 + $0x30] sm:$0xff]
  %v22 = vld [vmem:[%s0 + $0x38] sm:$0xff]
  %v23 = vld [vmem:[%s0 + $0x40] sm:$0xff]
  %v24 = vld [vmem:[%s0 + $0x48] sm:$0xff]
  %v25 = vld [vmem:[%s0 + $0x50] sm:$0xff]
  %v26 = vld [vmem:[%s0 + $0x58] sm:$0xff]
  %v27 = vld [vmem:[%s0 + $0x60] sm:$0xff]
  %v28 = vld [vmem:[%s0 + $0x68] sm:$0xff]
  %v29 = vld [vmem:[%s0 + $0x70] sm:$0xff]
  %v30 = vld [vmem:[%s0 + $0x78] sm:$0xff]
  %v31 = vld [vmem:[%s1] sm:$0xf]
  %v32 = vld [vmem:[%s1 + $0x4] sm:$0xf]
  %v33 = vld [vmem:[%s1 + $0x8] sm:$0xf]
  %v34 = vld [vmem:[%s1 + $0xc] sm:$0xf]
  %v35 = vld [vmem:[%s1 + $0x10] sm:$0xf]
  %v36 = vld [vmem:[%s1 + $0x14] sm:$0xf]
  %v37 = vld [vmem:[%s1 + $0x18] sm:$0xf]
  %v38 = vld [vmem:[%s1 + $0x1c] sm:$0xf]
  %v39 = vld [vmem:[%s1 + $0x20] sm:$0xf]
  %v40 = vld [vmem:[%s1 + $0x24] sm:$0xf]
  %v41 = vld [vmem:[%s1 + $0x28] sm:$0xf]
  %v42 = vld [vmem:[%s1 + $0x2c] sm:$0xf]
  %v43 = vld [vmem:[%s1 + $0x30] sm:$0xf]
  %v44 = vld [vmem:[%s1 + $0x34] sm:$0xf]
  %v45 = vld [vmem:[%s1 + $0x38] sm:$0xf]
  %v46 = vld [vmem:[%s1 + $0x3c] sm:$0xf]
  %v47 = vld [vmem:[%s1 + $0x40] sm:$0xf]
  %v48 = vld [vmem:[%s1 + $0x44] sm:$0xf]
  %v49 = vld [vmem:[%s1 + $0x48] sm:$0xf]
  %v50 = vld [vmem:[%s1 + $0x4c] sm:$0xf]
  %v51 = vld [vmem:[%s2] sm:$0x1]
  %v53 = vlaneseq
  %v54 = vshrl.u32 %v53, 7
  %v55 = vsub.s32 0, %v54
  %v56 = vrot.slane %v51, %v55
  %v74 = vunpack.c.l.b16 %v15
  %v75 = vunpack.c.h.b16 %v15
  %v76 = vunpack.c.l.b16 %v16
  %v77 = vunpack.c.h.b16 %v16
  %v78 = vunpack.c.l.b16 %v17
  %v79 = vunpack.c.h.b16 %v17
  %v80 = vunpack.c.l.b16 %v18
  %v81 = vunpack.c.h.b16 %v18
  %v82 = vunpack.c.l.b16 %v19
  %v83 = vunpack.c.h.b16 %v19
  %v84 = vunpack.c.l.b16 %v20
  %v85 = vunpack.c.h.b16 %v20
  %v86 = vunpack.c.l.b16 %v21
  %v87 = vunpack.c.h.b16 %v21
  %v88 = vunpack.c.l.b16 %v22
  %v89 = vunpack.c.h.b16 %v22
  %v90 = vunpack.c.l.b16 %v23
  %v91 = vunpack.c.h.b16 %v23
  %v92 = vunpack.c.l.b16 %v24
  %v93 = vunpack.c.h.b16 %v24
  %v94 = vunpack.c.l.b16 %v25
  %v95 = vunpack.c.h.b16 %v25
  %v96 = vunpack.c.l.b16 %v26
  %v97 = vunpack.c.h.b16 %v26
  %v98 = vunpack.c.l.b16 %v27
  %v99 = vunpack.c.h.b16 %v27
  %v100 = vunpack.c.l.b16 %v28
  %v101 = vunpack.c.h.b16 %v28
  %v102 = vunpack.c.l.b16 %v29
  %v103 = vunpack.c.h.b16 %v29
  %v104 = vunpack.c.l.b16 %v30
  %v105 = vunpack.c.h.b16 %v30
  %v106 = vpack.c.b16 %v76, %v74
  %v107 = vpack.c.b16 %v77, %v75
  %v108 = vpack.c.b16 %v80, %v78
  %v109 = vpack.c.b16 %v81, %v79
  %v110 = vpack.c.b16 %v84, %v82
  %v111 = vpack.c.b16 %v85, %v83
  %v112 = vpack.c.b16 %v88, %v86
  %v113 = vpack.c.b16 %v89, %v87
  %v114 = vpack.c.b16 %v92, %v90
  %v115 = vpack.c.b16 %v93, %v91
  %v116 = vpack.c.b16 %v96, %v94
  %v117 = vpack.c.b16 %v97, %v95
  %v118 = vpack.c.b16 %v100, %v98
  %v119 = vpack.c.b16 %v101, %v99
  %v120 = vpack.c.b16 %v104, %v102
  %v121 = vpack.c.b16 %v105, %v103
  %v150 = vunpack.c.l.b16 %v31
  %v151 = vunpack.c.l.b16 %v32
  %v152 = vunpack.c.l.b16 %v33
  %v153 = vunpack.c.l.b16 %v34
  %v154 = vunpack.c.l.b16 %v35
  %v155 = vunpack.c.l.b16 %v36
  %v156 = vunpack.c.l.b16 %v37
  %v157 = vunpack.c.l.b16 %v38
  %v158 = vunpack.c.l.b16 %v39
  %v159 = vunpack.c.l.b16 %v40
  %v160 = vunpack.c.l.b16 %v41
  %v161 = vunpack.c.l.b16 %v42
  %v162 = vunpack.c.l.b16 %v43
  %v163 = vunpack.c.l.b16 %v44
  %v164 = vunpack.c.l.b16 %v45
  %v165 = vunpack.c.l.b16 %v46
  %v166 = vunpack.c.l.b16 %v47
  %v167 = vunpack.c.l.b16 %v48
  %v168 = vunpack.c.l.b16 %v49
  %v169 = vunpack.c.l.b16 %v50
  %v170 = vpack.c.b16 %v151, %v150
  %v171 = vpack.c.b16 %v153, %v152
  %v172 = vpack.c.b16 %v155, %v154
  %v173 = vpack.c.b16 %v157, %v156
  %v174 = vpack.c.b16 %v159, %v158
  %v175 = vpack.c.b16 %v161, %v160
  %v176 = vpack.c.b16 %v163, %v162
  %v177 = vpack.c.b16 %v165, %v164
  %v178 = vpack.c.b16 %v167, %v166
  %v179 = vpack.c.b16 %v169, %v168
  %vm190 = vcmask 261120
  %v192 = vsel %vm190, %v107, 0
  %v195 = vsel %vm190, %v109, 0
  %v198 = vsel %vm190, %v111, 0
  %v201 = vsel %vm190, %v113, 0
  %v204 = vsel %vm190, %v115, 0
  %v207 = vsel %vm190, %v117, 0
  %v210 = vsel %vm190, %v119, 0
  %v213 = vsel %vm190, %v121, 0
  %215 = vmatprep.subr.bf16.mxu0 0
  %216 = vmatpush1.bf16.msra.mxu0 %v170
  %217 = vmatprep.subr.bf16.mxu0 0
  %218 = vmatpush1.bf16.msra.mxu0 %v171
  %219 = vmatprep.subr.bf16.mxu0 0
  %220 = vmatpush1.bf16.msra.mxu0 %v172
  %221 = vmatprep.subr.bf16.mxu0 0
  %222 = vmatpush1.bf16.msra.mxu0 %v173
  %223 = vmatprep.subr.bf16.mxu0 0
  %224 = vmatpush1.bf16.msra.mxu0 %v174
  %225 = vmatprep.subr.bf16.mxu0 0
  %226 = vmatpush1.bf16.msra.mxu0 %v175
  %227 = vmatprep.subr.bf16.mxu0 0
  %228 = vmatpush1.bf16.msra.mxu0 %v176
  %229 = vmatprep.subr.bf16.mxu0 0
  %230 = vmatpush1.bf16.msra.mxu0 %v177
  %231 = vmatprep.subr.bf16.mxu0 0
  %232 = vmatpush1.bf16.msra.mxu0 %v178
  %233 = vmatprep.subr.bf16.mxu0 0
  %234 = vmatpush1.bf16.msra.mxu0 %v179
  %235 = vmatprep.subr.bf16.mxu0 0
  %236 = vmatpush1.bf16.msra.mxu0 0
  %237 = vmatprep.subr.bf16.mxu0 0
  %238 = vmatpush1.bf16.msra.mxu0 0
  %239 = vmatprep.subr.bf16.mxu0 0
  %240 = vmatpush1.bf16.msra.mxu0 0
  %241 = vmatprep.subr.bf16.mxu0 0
  %242 = vmatpush1.bf16.msra.mxu0 0
  %243 = vmatprep.subr.bf16.mxu0 0
  %244 = vmatpush1.bf16.msra.mxu0 0
  %245 = vmatprep.subr.bf16.mxu0 0
  %246 = vmatpush1.bf16.msra.mxu0 0
  %247 = vmatprep.mubr.bf16.mxu0 %v192
  %248 = vmatmul.mubr.bf16.gmra.mrb[0].mxu0 %v106
  %v249 = vpop.f32.mrb[0].mxu0
  %v250 = vadd.f32 %v56, %v249
  %v251 = vpop.f32.mrb[0].mxu0
  %v252 = vpop.f32.mrb[0].mxu0
  %v253 = vadd.f32 %v56, %v252
  %v254 = vpop.f32.mrb[0].mxu0
  %255 = vmatprep.mubr.bf16.mxu0 %v195
  %256 = vmatmul.mubr.bf16.gmra.mrb[0].mxu0 %v108
  %v257 = vpop.f32.mrb[0].mxu0
  %v258 = vadd.f32 %v56, %v257
  %v259 = vpop.f32.mrb[0].mxu0
  %v260 = vpop.f32.mrb[0].mxu0
  %v261 = vadd.f32 %v56, %v260
  %v262 = vpop.f32.mrb[0].mxu0
  %263 = vmatprep.mubr.bf16.mxu0 %v198
  %264 = vmatmul.mubr.bf16.gmra.mrb[0].mxu0 %v110
  %v265 = vpop.f32.mrb[0].mxu0
  %v266 = vadd.f32 %v56, %v265
  %v267 = vpop.f32.mrb[0].mxu0
  %v268 = vpop.f32.mrb[0].mxu0
  %v269 = vadd.f32 %v56, %v268
  %v270 = vpop.f32.mrb[0].mxu0
  %271 = vmatprep.mubr.bf16.mxu0 %v201
  %272 = vmatmul.mubr.bf16.gmra.mrb[0].mxu0 %v112
  %v273 = vpop.f32.mrb[0].mxu0
  %v274 = vadd.f32 %v56, %v273
  %v275 = vpop.f32.mrb[0].mxu0
  %v276 = vpop.f32.mrb[0].mxu0
  %v277 = vadd.f32 %v56, %v276
  %v278 = vpop.f32.mrb[0].mxu0
  %279 = vmatprep.mubr.bf16.mxu0 %v204
  %280 = vmatmul.mubr.bf16.gmra.mrb[0].mxu0 %v114
  %v281 = vpop.f32.mrb[0].mxu0
  %v282 = vadd.f32 %v56, %v281
  %v283 = vpop.f32.mrb[0].mxu0
  %v284 = vpop.f32.mrb[0].mxu0
  %v285 = vadd.f32 %v56, %v284
  %v286 = vpop.f32.mrb[0].mxu0
  %287 = vmatprep.mubr.bf16.mxu0 %v207
  %288 = vmatmul.mubr.bf16.gmra.mrb[0].mxu0 %v116
  %v289 = vpop.f32.mrb[0].mxu0
  %v290 = vadd.f32 %v56, %v289
  %v291 = vpop.f32.mrb[0].mxu0
  %v292 = vpop.f32.mrb[0].mxu0
  %v293 = vadd.f32 %v56, %v292
  %v294 = vpop.f32.mrb[0].mxu0
  %295 = vmatprep.mubr.bf16.mxu0 %v210
  %296 = vmatmul.mubr.bf16.gmra.mrb[0].mxu0 %v118
  %v297 = vpop.f32.mrb[0].mxu0
  %v298 = vadd.f32 %v56, %v297
  %v299 = vpop.f32.mrb[0].mxu0
  %v300 = vpop.f32.mrb[0].mxu0
  %v301 = vadd.f32 %v56, %v300
  %v302 = vpop.f32.mrb[0].mxu0
  %303 = vmatprep.mubr.bf16.mxu0 %v213
  %304 = vmatmul.mubr.bf16.gmra.mrb[0].mxu0 %v120
  %v305 = vpop.f32.mrb[0].mxu0
  %v306 = vadd.f32 %v56, %v305
  %v307 = vpop.f32.mrb[0].mxu0
  %v308 = vpop.f32.mrb[0].mxu0
  %v309 = vadd.f32 %v56, %v308
  %v310 = vpop.f32.mrb[0].mxu0
  %311 = vdwg.mxu0
  %v312 = vmax.f32 %v250, 0.0
  %v313 = vmax.f32 %v253, 0.0
  %v314 = vmax.f32 %v258, 0.0
  %v315 = vmax.f32 %v261, 0.0
  %v316 = vmax.f32 %v266, 0.0
  %v317 = vmax.f32 %v269, 0.0
  %v318 = vmax.f32 %v274, 0.0
  %v319 = vmax.f32 %v277, 0.0
  %v320 = vmax.f32 %v282, 0.0
  %v321 = vmax.f32 %v285, 0.0
  %v322 = vmax.f32 %v290, 0.0
  %v323 = vmax.f32 %v293, 0.0
  %v324 = vmax.f32 %v298, 0.0
  %v325 = vmax.f32 %v301, 0.0
  %v326 = vmax.f32 %v306, 0.0
  %v327 = vmax.f32 %v309, 0.0
  %328 = vst [vmem:[%s3] sm:$0xff] %v312
  %329 = vst [vmem:[%s3 + $0x8] sm:$0xff] %v313
  %330 = vst [vmem:[%s3 + $0x10] sm:$0xff] %v314
  %331 = vst [vmem:[%s3 + $0x18] sm:$0xff] %v315
  %332 = vst [vmem:[%s3 + $0x20] sm:$0xff] %v316
  %333 = vst [vmem:[%s3 + $0x28] sm:$0xff] %v317
  %334 = vst [vmem:[%s3 + $0x30] sm:$0xff] %v318
  %335 = vst [vmem:[%s3 + $0x38] sm:$0xff] %v319
  %336 = vst [vmem:[%s3 + $0x40] sm:$0xff] %v320
  %337 = vst [vmem:[%s3 + $0x48] sm:$0xff] %v321
  %338 = vst [vmem:[%s3 + $0x50] sm:$0xff] %v322
  %339 = vst [vmem:[%s3 + $0x58] sm:$0xff] %v323
  %340 = vst [vmem:[%s3 + $0x60] sm:$0xff] %v324
  %341 = vst [vmem:[%s3 + $0x68] sm:$0xff] %v325
  %342 = vst [vmem:[%s3 + $0x70] sm:$0xff] %v326
  %343 = vst [vmem:[%s3 + $0x78] sm:$0xff] %v327
  // Predicated region
  $region14: #{thermal_forward.12} parent=0 // pred_check
    _
  $region15: #{thermal_forward.12} parent=0 // pred_check_branch
    %345 = sbr.rel (0) target = $region17
  $region16: #{thermal_forward.12} parent=0 // pred_region
    _
  $region17: #{thermal_forward.12} parent=0 // pred_fallthru
    _
  // Predicated region
  $region18: #{thermal_forward.12} parent=0 // pred_check
    _
  $region19: #{thermal_forward.12} parent=0 // pred_check_branch
    %347 = sbr.rel (0) target = $region21
  $region20: #{thermal_forward.12} parent=0 // pred_region
    _
  $region21: #{thermal_forward.12} parent=0 // pred_fallthru
    _

// kernel: thermal_forward.16
$region0: #{thermal_forward.16}
  #allocation0 [shape = 'u32[]', space=smem, size = 0x4, offset = 0x4, fixed_abs, tag = 'smem constant byte address 0x4 - core index']
  #allocation1 [shape = 'u32[144,128]{1,0:T(1,128)}', space=vmem, size = 0x12000, scoped, tag = 'internal scratch']
  %s0 = inlined_call_operand.vmem [shape: bf16[32,64], index: 0, kind: input, shape index: {}]
  %s1 = inlined_call_operand.vmem [shape: bf16[64,256], index: 1, kind: input, shape index: {}]
  %s2 = inlined_call_operand.vmem [shape: f32[1,256], index: 2, kind: input, shape index: {}]
  %s3 = inlined_call_operand.vmem [shape: f32[32,256], index: 3, kind: output, shape index: {}]
  %s4 = sld [smem:[#allocation0]]
  $region22: #{thermal_forward.16} parent=0
    _
  %s6 = ssub.s32 1, %s4
  %s7 = scalar_select 0, %s6, %s4
  // Predicated region
  $region2: #{thermal_forward.16} parent=0 // pred_check
    _
  $region3: #{thermal_forward.16} parent=0 // pred_check_branch
    %9 = sbr.rel (0) target = $region5
  $region4: #{thermal_forward.16} parent=0 // pred_region
    _
  $region5: #{thermal_forward.16} parent=0 // pred_fallthru
    _
  // Predicated region
  $region6: #{thermal_forward.16} parent=0 // pred_check
    _
  $region7: #{thermal_forward.16} parent=0 // pred_check_branch
    %11 = sbr.rel (0) target = $region9
  $region8: #{thermal_forward.16} parent=0 // pred_region
    _
  $region9: #{thermal_forward.16} parent=0 // pred_fallthru
    _
  // Predicated region
  $region10: #{thermal_forward.16} parent=0 // pred_check
    _
  $region11: #{thermal_forward.16} parent=0 // pred_check_branch
    %13 = sbr.rel (0) target = $region13
  $region12: #{thermal_forward.16} parent=0 // pred_region
    _
  $region13: #{thermal_forward.16} parent=0 // pred_fallthru
    _
  %v15 = vld [vmem:[%s0] sm:$0xf]
  %v16 = vld [vmem:[%s0 + $0x4] sm:$0xf]
  %v17 = vld [vmem:[%s0 + $0x8] sm:$0xf]
  %v18 = vld [vmem:[%s0 + $0xc] sm:$0xf]
  %v19 = vld [vmem:[%s1] sm:$0xff]
  %v20 = vld [vmem:[%s1 + $0x8] sm:$0xff]
  %v21 = vld [vmem:[%s1 + $0x10] sm:$0xff]
  %v22 = vld [vmem:[%s1 + $0x18] sm:$0xff]
  %v23 = vld [vmem:[%s1 + $0x20] sm:$0xff]
  %v24 = vld [vmem:[%s1 + $0x28] sm:$0xff]
  %v25 = vld [vmem:[%s1 + $0x30] sm:$0xff]
  %v26 = vld [vmem:[%s1 + $0x38] sm:$0xff]
  %v27 = vld [vmem:[%s2] sm:$0x3]
  %v29 = vlaneseq
  %v30 = vshrl.u32 %v29, 7
  %v31 = vsub.s32 0, %v30
  %v32 = vrot.slane %v27, %v31
  %v33 = vlaneseq
  %v34 = vshrl.u32 %v33, 7
  %v35 = vsub.s32 1, %v34
  %v36 = vrot.slane %v27, %v35
  %v43 = vunpack.c.l.b16 %v15
  %v44 = vunpack.c.l.b16 %v16
  %v45 = vunpack.c.l.b16 %v17
  %v46 = vunpack.c.l.b16 %v18
  %v47 = vpack.c.b16 %v44, %v43
  %v48 = vpack.c.b16 %v46, %v45
  %v57 = vunpack.c.l.b16 %v19
  %v58 = vunpack.c.h.b16 %v19
  %v59 = vunpack.c.l.b16 %v20
  %v60 = vunpack.c.h.b16 %v20
  %v61 = vunpack.c.l.b16 %v21
  %v62 = vunpack.c.h.b16 %v21
  %v63 = vunpack.c.l.b16 %v22
  %v64 = vunpack.c.h.b16 %v22
  %v65 = vunpack.c.l.b16 %v23
  %v66 = vunpack.c.h.b16 %v23
  %v67 = vunpack.c.l.b16 %v24
  %v68 = vunpack.c.h.b16 %v24
  %v69 = vunpack.c.l.b16 %v25
  %v70 = vunpack.c.h.b16 %v25
  %v71 = vunpack.c.l.b16 %v26
  %v72 = vunpack.c.h.b16 %v26
  %v73 = vpack.c.b16 %v59, %v57
  %v74 = vpack.c.b16 %v60, %v58
  %v75 = vpack.c.b16 %v63, %v61
  %v76 = vpack.c.b16 %v64, %v62
  %v77 = vpack.c.b16 %v67, %v65
  %v78 = vpack.c.b16 %v68, %v66
  %v79 = vpack.c.b16 %v71, %v69
  %v80 = vpack.c.b16 %v72, %v70
  %vm89 = vcmask 523264
  %v91 = vsel %vm89, %v47, 0
  %v94 = vsel %vm89, %v48, 0
  %96 = vmatprep.subr.bf16.mxu0 %v74
  %97 = vmatpush1.bf16.msra.mxu0 %v73
  %98 = vmatprep.subr.bf16.mxu0 %v76
  %99 = vmatpush1.bf16.msra.mxu0 %v75
  %100 = vmatprep.subr.bf16.mxu0 %v78
  %101 = vmatpush1.bf16.msra.mxu0 %v77
  %102 = vmatprep.subr.bf16.mxu0 %v80
  %103 = vmatpush1.bf16.msra.mxu0 %v79
  %104 = vmatprep.subr.bf16.mxu0 0
  %105 = vmatpush1.bf16.msra.mxu0 0
  %106 = vmatprep.subr.bf16.mxu0 0
  %107 = vmatpush1.bf16.msra.mxu0 0
  %108 = vmatprep.subr.bf16.mxu0 0
  %109 = vmatpush1.bf16.msra.mxu0 0
  %110 = vmatprep.subr.bf16.mxu0 0
  %111 = vmatpush1.bf16.msra.mxu0 0
  %112 = vmatprep.subr.bf16.mxu0 0
  %113 = vmatpush1.bf16.msra.mxu0 0
  %114 = vmatprep.subr.bf16.mxu0 0
  %115 = vmatpush1.bf16.msra.mxu0 0
  %116 = vmatprep.subr.bf16.mxu0 0
  %117 = vmatpush1.bf16.msra.mxu0 0
  %118 = vmatprep.subr.bf16.mxu0 0
  %119 = vmatpush1.bf16.msra.mxu0 0
  %120 = vmatprep.subr.bf16.mxu0 0
  %121 = vmatpush1.bf16.msra.mxu0 0
  %122 = vmatprep.subr.bf16.mxu0 0
  %123 = vmatpush1.bf16.msra.mxu0 0
  %124 = vmatprep.subr.bf16.mxu0 0
  %125 = vmatpush1.bf16.msra.mxu0 0
  %126 = vmatprep.subr.bf16.mxu0 0
  %127 = vmatpush1.bf16.msra.mxu0 0
  %128 = vmatprep.mubr.bf16.mxu0 0
  %129 = vmatmul.mubr.bf16.gmra.mrb[0].mxu0 %v91
  %v130 = vpop.f32.mrb[0].mxu0
  %v131 = vadd.f32 %v32, %v130
  %v132 = vpop.f32.mrb[0].mxu0
  %v133 = vadd.f32 %v36, %v132
  %v134 = vpop.f32.mrb[0].mxu0
  %v135 = vadd.f32 %v32, %v134
  %v136 = vpop.f32.mrb[0].mxu0
  %v137 = vadd.f32 %v36, %v136
  %138 = vmatprep.mubr.bf16.mxu0 0
  %139 = vmatmul.mubr.bf16.gmra.mrb[0].mxu0 %v94
  %v140 = vpop.f32.mrb[0].mxu0
  %v141 = vadd.f32 %v32, %v140
  %v142 = vpop.f32.mrb[0].mxu0
  %v143 = vadd.f32 %v36, %v142
  %v144 = vpop.f32.mrb[0].mxu0
  %v145 = vadd.f32 %v32, %v144
  %v146 = vpop.f32.mrb[0].mxu0
  %v147 = vadd.f32 %v36, %v146
  %148 = vdwg.mxu0
  %149 = vst [vmem:[%s3] sm:$0xff] %v131
  %150 = vst [vmem:[%s3 + $0x8] sm:$0xff] %v133
  %151 = vst [vmem:[%s3 + $0x10] sm:$0xff] %v135
  %152 = vst [vmem:[%s3 + $0x18] sm:$0xff] %v137
  %153 = vst [vmem:[%s3 + $0x20] sm:$0xff] %v141
  %154 = vst [vmem:[%s3 + $0x28] sm:$0xff] %v143
  %155 = vst [vmem:[%s3 + $0x30] sm:$0xff] %v145
  %156 = vst [vmem:[%s3 + $0x38] sm:$0xff] %v147
  // Predicated region
  $region14: #{thermal_forward.16} parent=0 // pred_check
    _
  $region15: #{thermal_forward.16} parent=0 // pred_check_branch
    %158 = sbr.rel (0) target = $region17
  $region16: #{thermal_forward.16} parent=0 // pred_region
    _
  $region17: #{thermal_forward.16} parent=0 // pred_fallthru
    _
  // Predicated region
  $region18: #{thermal_forward.16} parent=0 // pred_check
    _
  $region19: #{thermal_forward.16} parent=0 // pred_check_branch
    %160 = sbr.rel (0) target = $region21
  $region20: #{thermal_forward.16} parent=0 // pred_region
    _
  $region21: #{thermal_forward.16} parent=0 // pred_fallthru
    _

// kernel: thermal_forward.17
$region0: #{thermal_forward.17}
  #allocation0 [shape = 'u32[]', space=smem, size = 0x4, offset = 0x4, fixed_abs, tag = 'smem constant byte address 0x4 - core index']
  #allocation1 [shape = 'u32[144,128]{1,0:T(1,128)}', space=vmem, size = 0x12000, scoped, tag = 'internal scratch']
  %s0 = inlined_call_operand.vmem [shape: bf16[32,64], index: 0, kind: input, shape index: {}]
  %s1 = inlined_call_operand.vmem [shape: bf16[64,256], index: 1, kind: input, shape index: {}]
  %s2 = inlined_call_operand.vmem [shape: f32[1,256], index: 2, kind: input, shape index: {}]
  %s3 = inlined_call_operand.vmem [shape: f32[32,256], index: 3, kind: input, shape index: {}]
  %s4 = inlined_call_operand.vmem [shape: f32[32,256], index: 4, kind: output, shape index: {}]
  %s5 = sld [smem:[#allocation0]]
  $region26: #{thermal_forward.17} parent=0
    _
  %s7 = ssub.s32 1, %s5
  %s8 = scalar_select 0, %s7, %s5
  // Predicated region
  $region2: #{thermal_forward.17} parent=0 // pred_check
    _
  $region3: #{thermal_forward.17} parent=0 // pred_check_branch
    %10 = sbr.rel (0) target = $region5
  $region4: #{thermal_forward.17} parent=0 // pred_region
    _
  $region5: #{thermal_forward.17} parent=0 // pred_fallthru
    _
  // Predicated region
  $region6: #{thermal_forward.17} parent=0 // pred_check
    _
  $region7: #{thermal_forward.17} parent=0 // pred_check_branch
    %12 = sbr.rel (0) target = $region9
  $region8: #{thermal_forward.17} parent=0 // pred_region
    _
  $region9: #{thermal_forward.17} parent=0 // pred_fallthru
    _
  // Predicated region
  $region10: #{thermal_forward.17} parent=0 // pred_check
    _
  $region11: #{thermal_forward.17} parent=0 // pred_check_branch
    %14 = sbr.rel (0) target = $region13
  $region12: #{thermal_forward.17} parent=0 // pred_region
    _
  $region13: #{thermal_forward.17} parent=0 // pred_fallthru
    _
  // Predicated region
  $region14: #{thermal_forward.17} parent=0 // pred_check
    _
  $region15: #{thermal_forward.17} parent=0 // pred_check_branch
    %16 = sbr.rel (0) target = $region17
  $region16: #{thermal_forward.17} parent=0 // pred_region
    _
  $region17: #{thermal_forward.17} parent=0 // pred_fallthru
    _
  %v18 = vld [vmem:[%s0] sm:$0xf]
  %v19 = vld [vmem:[%s0 + $0x4] sm:$0xf]
  %v20 = vld [vmem:[%s0 + $0x8] sm:$0xf]
  %v21 = vld [vmem:[%s0 + $0xc] sm:$0xf]
  %v22 = vld [vmem:[%s1] sm:$0xff]
  %v23 = vld [vmem:[%s1 + $0x8] sm:$0xff]
  %v24 = vld [vmem:[%s1 + $0x10] sm:$0xff]
  %v25 = vld [vmem:[%s1 + $0x18] sm:$0xff]
  %v26 = vld [vmem:[%s1 + $0x20] sm:$0xff]
  %v27 = vld [vmem:[%s1 + $0x28] sm:$0xff]
  %v28 = vld [vmem:[%s1 + $0x30] sm:$0xff]
  %v29 = vld [vmem:[%s1 + $0x38] sm:$0xff]
  %v30 = vld [vmem:[%s2] sm:$0x3]
  %v32 = vlaneseq
  %v33 = vshrl.u32 %v32, 7
  %v34 = vsub.s32 0, %v33
  %v35 = vrot.slane %v30, %v34
  %v36 = vlaneseq
  %v37 = vshrl.u32 %v36, 7
  %v38 = vsub.s32 1, %v37
  %v39 = vrot.slane %v30, %v38
  %v46 = vunpack.c.l.b16 %v18
  %v47 = vunpack.c.l.b16 %v19
  %v48 = vunpack.c.l.b16 %v20
  %v49 = vunpack.c.l.b16 %v21
  %v50 = vpack.c.b16 %v47, %v46
  %v51 = vpack.c.b16 %v49, %v48
  %v60 = vunpack.c.l.b16 %v22
  %v61 = vunpack.c.h.b16 %v22
  %v62 = vunpack.c.l.b16 %v23
  %v63 = vunpack.c.h.b16 %v23
  %v64 = vunpack.c.l.b16 %v24
  %v65 = vunpack.c.h.b16 %v24
  %v66 = vunpack.c.l.b16 %v25
  %v67 = vunpack.c.h.b16 %v25
  %v68 = vunpack.c.l.b16 %v26
  %v69 = vunpack.c.h.b16 %v26
  %v70 = vunpack.c.l.b16 %v27
  %v71 = vunpack.c.h.b16 %v27
  %v72 = vunpack.c.l.b16 %v28
  %v73 = vunpack.c.h.b16 %v28
  %v74 = vunpack.c.l.b16 %v29
  %v75 = vunpack.c.h.b16 %v29
  %v76 = vpack.c.b16 %v62, %v60
  %v77 = vpack.c.b16 %v63, %v61
  %v78 = vpack.c.b16 %v66, %v64
  %v79 = vpack.c.b16 %v67, %v65
  %v80 = vpack.c.b16 %v70, %v68
  %v81 = vpack.c.b16 %v71, %v69
  %v82 = vpack.c.b16 %v74, %v72
  %v83 = vpack.c.b16 %v75, %v73
  %vm92 = vcmask 523264
  %v94 = vsel %vm92, %v50, 0
  %v97 = vsel %vm92, %v51, 0
  %99 = vmatprep.subr.bf16.mxu0 %v77
  %100 = vmatpush1.bf16.msra.mxu0 %v76
  %101 = vmatprep.subr.bf16.mxu0 %v79
  %102 = vmatpush1.bf16.msra.mxu0 %v78
  %103 = vmatprep.subr.bf16.mxu0 %v81
  %104 = vmatpush1.bf16.msra.mxu0 %v80
  %105 = vmatprep.subr.bf16.mxu0 %v83
  %106 = vmatpush1.bf16.msra.mxu0 %v82
  %107 = vmatprep.subr.bf16.mxu0 0
  %108 = vmatpush1.bf16.msra.mxu0 0
  %109 = vmatprep.subr.bf16.mxu0 0
  %110 = vmatpush1.bf16.msra.mxu0 0
  %111 = vmatprep.subr.bf16.mxu0 0
  %112 = vmatpush1.bf16.msra.mxu0 0
  %113 = vmatprep.subr.bf16.mxu0 0
  %114 = vmatpush1.bf16.msra.mxu0 0
  %115 = vmatprep.subr.bf16.mxu0 0
  %116 = vmatpush1.bf16.msra.mxu0 0
  %117 = vmatprep.subr.bf16.mxu0 0
  %118 = vmatpush1.bf16.msra.mxu0 0
  %119 = vmatprep.subr.bf16.mxu0 0
  %120 = vmatpush1.bf16.msra.mxu0 0
  %121 = vmatprep.subr.bf16.mxu0 0
  %122 = vmatpush1.bf16.msra.mxu0 0
  %123 = vmatprep.subr.bf16.mxu0 0
  %124 = vmatpush1.bf16.msra.mxu0 0
  %125 = vmatprep.subr.bf16.mxu0 0
  %126 = vmatpush1.bf16.msra.mxu0 0
  %127 = vmatprep.subr.bf16.mxu0 0
  %128 = vmatpush1.bf16.msra.mxu0 0
  %129 = vmatprep.subr.bf16.mxu0 0
  %130 = vmatpush1.bf16.msra.mxu0 0
  %131 = vmatprep.mubr.bf16.mxu0 0
  %132 = vmatmul.mubr.bf16.gmra.mrb[0].mxu0 %v94
  %v133 = vpop.f32.mrb[0].mxu0
  %v134 = vadd.f32 %v35, %v133
  %v135 = vpop.f32.mrb[0].mxu0
  %v136 = vadd.f32 %v39, %v135
  %v137 = vpop.f32.mrb[0].mxu0
  %v138 = vadd.f32 %v35, %v137
  %v139 = vpop.f32.mrb[0].mxu0
  %v140 = vadd.f32 %v39, %v139
  %141 = vmatprep.mubr.bf16.mxu0 0
  %142 = vmatmul.mubr.bf16.gmra.mrb[0].mxu0 %v97
  %v143 = vpop.f32.mrb[0].mxu0
  %v144 = vadd.f32 %v35, %v143
  %v145 = vpop.f32.mrb[0].mxu0
  %v146 = vadd.f32 %v39, %v145
  %v147 = vpop.f32.mrb[0].mxu0
  %v148 = vadd.f32 %v35, %v147
  %v149 = vpop.f32.mrb[0].mxu0
  %v150 = vadd.f32 %v39, %v149
  %151 = vdwg.mxu0
  %v152 = vld [vmem:[%s3] sm:$0xff]
  %v153 = vld [vmem:[%s3 + $0x8] sm:$0xff]
  %v154 = vld [vmem:[%s3 + $0x10] sm:$0xff]
  %v155 = vld [vmem:[%s3 + $0x18] sm:$0xff]
  %v156 = vld [vmem:[%s3 + $0x20] sm:$0xff]
  %v157 = vld [vmem:[%s3 + $0x28] sm:$0xff]
  %v158 = vld [vmem:[%s3 + $0x30] sm:$0xff]
  %v159 = vld [vmem:[%s3 + $0x38] sm:$0xff]
  %v160 = vadd.f32 %v134, %v152
  %v161 = vadd.f32 %v136, %v153
  %v162 = vadd.f32 %v138, %v154
  %v163 = vadd.f32 %v140, %v155
  %v164 = vadd.f32 %v144, %v156
  %v165 = vadd.f32 %v146, %v157
  %v166 = vadd.f32 %v148, %v158
  %v167 = vadd.f32 %v150, %v159
  %v168 = vmax.f32 %v160, 0.0
  %v169 = vmax.f32 %v161, 0.0
  %v170 = vmax.f32 %v162, 0.0
  %v171 = vmax.f32 %v163, 0.0
  %v172 = vmax.f32 %v164, 0.0
  %v173 = vmax.f32 %v165, 0.0
  %v174 = vmax.f32 %v166, 0.0
  %v175 = vmax.f32 %v167, 0.0
  %176 = vst [vmem:[%s4] sm:$0xff] %v168
  %177 = vst [vmem:[%s4 + $0x8] sm:$0xff] %v169
  %178 = vst [vmem:[%s4 + $0x10] sm:$0xff] %v170
  %179 = vst [vmem:[%s4 + $0x18] sm:$0xff] %v171
  %180 = vst [vmem:[%s4 + $0x20] sm:$0xff] %v172
  %181 = vst [vmem:[%s4 + $0x28] sm:$0xff] %v173
  %182 = vst [vmem:[%s4 + $0x30] sm:$0xff] %v174
  %183 = vst [vmem:[%s4 + $0x38] sm:$0xff] %v175
  // Predicated region
  $region18: #{thermal_forward.17} parent=0 // pred_check
    _
  $region19: #{thermal_forward.17} parent=0 // pred_check_branch
    %185 = sbr.rel (0) target = $region21
  $region20: #{thermal_forward.17} parent=0 // pred_region
    _
  $region21: #{thermal_forward.17} parent=0 // pred_fallthru
    _
  // Predicated region
  $region22: #{thermal_forward.17} parent=0 // pred_check
    _
  $region23: #{thermal_forward.17} parent=0 // pred_check_branch
    %187 = sbr.rel (0) target = $region25
  $region24: #{thermal_forward.17} parent=0 // pred_region
    _
  $region25: #{thermal_forward.17} parent=0 // pred_fallthru
    _

// kernel: thermal_forward.15
$region0: #{thermal_forward.15}
  #allocation0 [shape = 'u32[]', space=smem, size = 0x4, offset = 0x4, fixed_abs, tag = 'smem constant byte address 0x4 - core index']
  #allocation1 [shape = 'u32[144,128]{1,0:T(1,128)}', space=vmem, size = 0x12000, scoped, tag = 'internal scratch']
  %s0 = inlined_call_operand.vmem [shape: bf16[32,576], index: 0, kind: input, shape index: {}]
  %s1 = inlined_call_operand.vmem [shape: bf16[576,128], index: 1, kind: input, shape index: {}]
  %s2 = inlined_call_operand.vmem [shape: f32[1,128], index: 2, kind: input, shape index: {}]
  %s3 = inlined_call_operand.vmem [shape: f32[32,128], index: 3, kind: output, shape index: {}]
  %s4 = sld [smem:[#allocation0]]
  $region22: #{thermal_forward.15} parent=0
    _
  %s6 = ssub.s32 1, %s4
  %s7 = scalar_select 0, %s6, %s4
  // Predicated region
  $region2: #{thermal_forward.15} parent=0 // pred_check
    _
  $region3: #{thermal_forward.15} parent=0 // pred_check_branch
    %9 = sbr.rel (0) target = $region5
  $region4: #{thermal_forward.15} parent=0 // pred_region
    _
  $region5: #{thermal_forward.15} parent=0 // pred_fallthru
    _
  // Predicated region
  $region6: #{thermal_forward.15} parent=0 // pred_check
    _
  $region7: #{thermal_forward.15} parent=0 // pred_check_branch
    %11 = sbr.rel (0) target = $region9
  $region8: #{thermal_forward.15} parent=0 // pred_region
    _
  $region9: #{thermal_forward.15} parent=0 // pred_fallthru
    _
  // Predicated region
  $region10: #{thermal_forward.15} parent=0 // pred_check
    _
  $region11: #{thermal_forward.15} parent=0 // pred_check_branch
    %13 = sbr.rel (0) target = $region13
  $region12: #{thermal_forward.15} parent=0 // pred_region
    _
  $region13: #{thermal_forward.15} parent=0 // pred_fallthru
    _
  %v15 = vld [vmem:[%s0] sm:$0xff]
  %v16 = vld [vmem:[%s0 + $0x8] sm:$0xff]
  %v17 = vld [vmem:[%s0 + $0x10] sm:$0xf]
  %v18 = vld [vmem:[%s0 + $0x14] sm:$0xff]
  %v19 = vld [vmem:[%s0 + $0x1c] sm:$0xff]
  %v20 = vld [vmem:[%s0 + $0x24] sm:$0xf]
  %v21 = vld [vmem:[%s0 + $0x28] sm:$0xff]
  %v22 = vld [vmem:[%s0 + $0x30] sm:$0xff]
  %v23 = vld [vmem:[%s0 + $0x38] sm:$0xf]
  %v24 = vld [vmem:[%s0 + $0x3c] sm:$0xff]
  %v25 = vld [vmem:[%s0 + $0x44] sm:$0xff]
  %v26 = vld [vmem:[%s0 + $0x4c] sm:$0xf]
  %v27 = vld [vmem:[%s1] sm:$0xf]
  %v28 = vld [vmem:[%s1 + $0x4] sm:$0xf]
  %v29 = vld [vmem:[%s1 + $0x8] sm:$0xf]
  %v30 = vld [vmem:[%s1 + $0xc] sm:$0xf]
  %v31 = vld [vmem:[%s1 + $0x10] sm:$0xf]
  %v32 = vld [vmem:[%s1 + $0x14] sm:$0xf]
  %v33 = vld [vmem:[%s1 + $0x18] sm:$0xf]
  %v34 = vld [vmem:[%s1 + $0x1c] sm:$0xf]
  %v35 = vld [vmem:[%s1 + $0x20] sm:$0xf]
  %v36 = vld [vmem:[%s1 + $0x24] sm:$0xf]
  %v37 = vld [vmem:[%s1 + $0x28] sm:$0xf]
  %v38 = vld [vmem:[%s1 + $0x2c] sm:$0xf]
  %v39 = vld [vmem:[%s1 + $0x30] sm:$0xf]
  %v40 = vld [vmem:[%s1 + $0x34] sm:$0xf]
  %v41 = vld [vmem:[%s1 + $0x38] sm:$0xf]
  %v42 = vld [vmem:[%s1 + $0x3c] sm:$0xf]
  %v43 = vld [vmem:[%s1 + $0x40] sm:$0xf]
  %v44 = vld [vmem:[%s1 + $0x44] sm:$0xf]
  %v45 = vld [vmem:[%s1 + $0x48] sm:$0xf]
  %v46 = vld [vmem:[%s1 + $0x4c] sm:$0xf]
  %v47 = vld [vmem:[%s1 + $0x50] sm:$0xf]
  %v48 = vld [vmem:[%s1 + $0x54] sm:$0xf]
  %v49 = vld [vmem:[%s1 + $0x58] sm:$0xf]
  %v50 = vld [vmem:[%s1 + $0x5c] sm:$0xf]
  %v51 = vld [vmem:[%s1 + $0x60] sm:$0xf]
  %v52 = vld [vmem:[%s1 + $0x64] sm:$0xf]
  %v53 = vld [vmem:[%s1 + $0x68] sm:$0xf]
  %v54 = vld [vmem:[%s1 + $0x6c] sm:$0xf]
  %v55 = vld [vmem:[%s1 + $0x70] sm:$0xf]
  %v56 = vld [vmem:[%s1 + $0x74] sm:$0xf]
  %v57 = vld [vmem:[%s1 + $0x78] sm:$0xf]
  %v58 = vld [vmem:[%s1 + $0x7c] sm:$0xf]
  %v59 = vld [vmem:[%s1 + $0x80] sm:$0xf]
  %v60 = vld [vmem:[%s1 + $0x84] sm:$0xf]
  %v61 = vld [vmem:[%s1 + $0x88] sm:$0xf]
  %v62 = vld [vmem:[%s1 + $0x8c] sm:$0xf]
  %v63 = vld [vmem:[%s1 + $0x90] sm:$0xf]
  %v64 = vld [vmem:[%s1 + $0x94] sm:$0xf]
  %v65 = vld [vmem:[%s1 + $0x98] sm:$0xf]
  %v66 = vld [vmem:[%s1 + $0x9c] sm:$0xf]
  %v67 = vld [vmem:[%s1 + $0xa0] sm:$0xf]
  %v68 = vld [vmem:[%s1 + $0xa4] sm:$0xf]
  %v69 = vld [vmem:[%s1 + $0xa8] sm:$0xf]
  %v70 = vld [vmem:[%s1 + $0xac] sm:$0xf]
  %v71 = vld [vmem:[%s1 + $0xb0] sm:$0xf]
  %v72 = vld [vmem:[%s1 + $0xb4] sm:$0xf]
  %v73 = vld [vmem:[%s1 + $0xb8] sm:$0xf]
  %v74 = vld [vmem:[%s1 + $0xbc] sm:$0xf]
  %v75 = vld [vmem:[%s1 + $0xc0] sm:$0xf]
  %v76 = vld [vmem:[%s1 + $0xc4] sm:$0xf]
  %v77 = vld [vmem:[%s1 + $0xc8] sm:$0xf]
  %v78 = vld [vmem:[%s1 + $0xcc] sm:$0xf]
  %v79 = vld [vmem:[%s1 + $0xd0] sm:$0xf]
  %v80 = vld [vmem:[%s1 + $0xd4] sm:$0xf]
  %v81 = vld [vmem:[%s1 + $0xd8] sm:$0xf]
  %v82 = vld [vmem:[%s1 + $0xdc] sm:$0xf]
  %v83 = vld [vmem:[%s1 + $0xe0] sm:$0xf]
  %v84 = vld [vmem:[%s1 + $0xe4] sm:$0xf]
  %v85 = vld [vmem:[%s1 + $0xe8] sm:$0xf]
  %v86 = vld [vmem:[%s1 + $0xec] sm:$0xf]
  %v87 = vld [vmem:[%s1 + $0xf0] sm:$0xf]
  %v88 = vld [vmem:[%s1 + $0xf4] sm:$0xf]
  %v89 = vld [vmem:[%s1 + $0xf8] sm:$0xf]
  %v90 = vld [vmem:[%s1 + $0xfc] sm:$0xf]
  %v91 = vld [vmem:[%s1 + $0x100] sm:$0xf]
  %v92 = vld [vmem:[%s1 + $0x104] sm:$0xf]
  %v93 = vld [vmem:[%s1 + $0x108] sm:$0xf]
  %v94 = vld [vmem:[%s1 + $0x10c] sm:$0xf]
  %v95 = vld [vmem:[%s1 + $0x110] sm:$0xf]
  %v96 = vld [vmem:[%s1 + $0x114] sm:$0xf]
  %v97 = vld [vmem:[%s1 + $0x118] sm:$0xf]
  %v98 = vld [vmem:[%s1 + $0x11c] sm:$0xf]
  %v99 = vld [vmem:[%s2] sm:$0x1]
  %v101 = vlaneseq
  %v102 = vshrl.u32 %v101, 7
  %v103 = vsub.s32 0, %v102
  %v104 = vrot.slane %v99, %v103
  %v118 = vunpack.c.l.b16 %v15
  %v119 = vunpack.c.h.b16 %v15
  %v120 = vunpack.c.l.b16 %v16
  %v121 = vunpack.c.h.b16 %v16
  %v122 = vunpack.c.l.b16 %v17
  %v123 = vunpack.c.l.b16 %v18
  %v124 = vunpack.c.h.b16 %v18
  %v125 = vunpack.c.l.b16 %v19
  %v126 = vunpack.c.h.b16 %v19
  %v127 = vunpack.c.l.b16 %v20
  %v128 = vunpack.c.l.b16 %v21
  %v129 = vunpack.c.h.b16 %v21
  %v130 = vunpack.c.l.b16 %v22
  %v131 = vunpack.c.h.b16 %v22
  %v132 = vunpack.c.l.b16 %v23
  %v133 = vunpack.c.l.b16 %v24
  %v134 = vunpack.c.h.b16 %v24
  %v135 = vunpack.c.l.b16 %v25
  %v136 = vunpack.c.h.b16 %v25
  %v137 = vunpack.c.l.b16 %v26
  %v138 = vpack.c.b16 %v123, %v118
  %v139 = vpack.c.b16 %v124, %v119
  %v140 = vpack.c.b16 %v125, %v120
  %v141 = vpack.c.b16 %v126, %v121
  %v142 = vpack.c.b16 %v127, %v122
  %v143 = vpack.c.b16 %v133, %v128
  %v144 = vpack.c.b16 %v134, %v129
  %v145 = vpack.c.b16 %v135, %v130
  %v146 = vpack.c.b16 %v136, %v131
  %v147 = vpack.c.b16 %v137, %v132
  %v228 = vunpack.c.l.b16 %v27
  %v229 = vunpack.c.l.b16 %v28
  %v230 = vunpack.c.l.b16 %v29
  %v231 = vunpack.c.l.b16 %v30
  %v232 = vunpack.c.l.b16 %v31
  %v233 = vunpack.c.l.b16 %v32
  %v234 = vunpack.c.l.b16 %v33
  %v235 = vunpack.c.l.b16 %v34
  %v236 = vunpack.c.l.b16 %v35
  %v237 = vunpack.c.l.b16 %v36
  %v238 = vunpack.c.l.b16 %v37
  %v239 = vunpack.c.l.b16 %v38
  %v240 = vunpack.c.l.b16 %v39
  %v241 = vunpack.c.l.b16 %v40
  %v242 = vunpack.c.l.b16 %v41
  %v243 = vunpack.c.l.b16 %v42
  %v244 = vunpack.c.l.b16 %v43
  %v245 = vunpack.c.l.b16 %v44
  %v246 = vunpack.c.l.b16 %v45
  %v247 = vunpack.c.l.b16 %v46
  %v248 = vunpack.c.l.b16 %v47
  %v249 = vunpack.c.l.b16 %v48
  %v250 = vunpack.c.l.b16 %v49
  %v251 = vunpack.c.l.b16 %v50
  %v252 = vunpack.c.l.b16 %v51
  %v253 = vunpack.c.l.b16 %v52
  %v254 = vunpack.c.l.b16 %v53
  %v255 = vunpack.c.l.b16 %v54
  %v256 = vunpack.c.l.b16 %v55
  %v257 = vunpack.c.l.b16 %v56
  %v258 = vunpack.c.l.b16 %v57
  %v259 = vunpack.c.l.b16 %v58
  %v260 = vunpack.c.l.b16 %v59
  %v261 = vunpack.c.l.b16 %v60
  %v262 = vunpack.c.l.b16 %v61
  %v263 = vunpack.c.l.b16 %v62
  %v264 = vunpack.c.l.b16 %v63
  %v265 = vunpack.c.l.b16 %v64
  %v266 = vunpack.c.l.b16 %v65
  %v267 = vunpack.c.l.b16 %v66
  %v268 = vunpack.c.l.b16 %v67
  %v269 = vunpack.c.l.b16 %v68
  %v270 = vunpack.c.l.b16 %v69
  %v271 = vunpack.c.l.b16 %v70
  %v272 = vunpack.c.l.b16 %v71
  %v273 = vunpack.c.l.b16 %v72
  %v274 = vunpack.c.l.b16 %v73
  %v275 = vunpack.c.l.b16 %v74
  %v276 = vunpack.c.l.b16 %v75
  %v277 = vunpack.c.l.b16 %v76
  %v278 = vunpack.c.l.b16 %v77
  %v279 = vunpack.c.l.b16 %v78
  %v280 = vunpack.c.l.b16 %v79
  %v281 = vunpack.c.l.b16 %v80
  %v282 = vunpack.c.l.b16 %v81
  %v283 = vunpack.c.l.b16 %v82
  %v284 = vunpack.c.l.b16 %v83
  %v285 = vunpack.c.l.b16 %v84
  %v286 = vunpack.c.l.b16 %v85
  %v287 = vunpack.c.l.b16 %v86
  %v288 = vunpack.c.l.b16 %v87
  %v289 = vunpack.c.l.b16 %v88
  %v290 = vunpack.c.l.b16 %v89
  %v291 = vunpack.c.l.b16 %v90
  %v292 = vunpack.c.l.b16 %v91
  %v293 = vunpack.c.l.b16 %v92
  %v294 = vunpack.c.l.b16 %v93
  %v295 = vunpack.c.l.b16 %v94
  %v296 = vunpack.c.l.b16 %v95
  %v297 = vunpack.c.l.b16 %v96
  %v298 = vunpack.c.l.b16 %v97
  %v299 = vunpack.c.l.b16 %v98
  %v300 = vpack.c.b16 %v229, %v228
  %v301 = vpack.c.b16 %v231, %v230
  %v302 = vpack.c.b16 %v233, %v232
  %v303 = vpack.c.b16 %v235, %v234
  %v304 = vpack.c.b16 %v237, %v236
  %v305 = vpack.c.b16 %v239, %v238
  %v306 = vpack.c.b16 %v241, %v240
  %v307 = vpack.c.b16 %v243, %v242
  %v308 = vpack.c.b16 %v245, %v244
  %v309 = vpack.c.b16 %v247, %v246
  %v310 = vpack.c.b16 %v249, %v248
  %v311 = vpack.c.b16 %v251, %v250
  %v312 = vpack.c.b16 %v253, %v252
  %v313 = vpack.c.b16 %v255, %v254
  %v314 = vpack.c.b16 %v257, %v256
  %v315 = vpack.c.b16 %v259, %v258
  %v316 = vpack.c.b16 %v261, %v260
  %v317 = vpack.c.b16 %v263, %v262
  %v318 = vpack.c.b16 %v265, %v264
  %v319 = vpack.c.b16 %v267, %v266
  %v320 = vpack.c.b16 %v269, %v268
  %v321 = vpack.c.b16 %v271, %v270
  %v322 = vpack.c.b16 %v273, %v272
  %v323 = vpack.c.b16 %v275, %v274
  %v324 = vpack.c.b16 %v277, %v276
  %v325 = vpack.c.b16 %v279, %v278
  %v326 = vpack.c.b16 %v281, %v280
  %v327 = vpack.c.b16 %v283, %v282
  %v328 = vpack.c.b16 %v285, %v284
  %v329 = vpack.c.b16 %v287, %v286
  %v330 = vpack.c.b16 %v289, %v288
  %v331 = vpack.c.b16 %v291, %v290
  %v332 = vpack.c.b16 %v293, %v292
  %v333 = vpack.c.b16 %v295, %v294
  %v334 = vpack.c.b16 %v297, %v296
  %v335 = vpack.c.b16 %v299, %v298
  %vm372 = vcmask 523264
  %v374 = vsel %vm372, %v142, 0
  %v377 = vsel %vm372, %v147, 0
  %379 = vmatprep.subr.bf16.mxu0 0
  %380 = vmatpush1.bf16.msra.mxu0 %v300
  %381 = vmatprep.subr.bf16.mxu0 0
  %382 = vmatpush1.bf16.msra.mxu0 %v301
  %383 = vmatprep.subr.bf16.mxu0 0
  %384 = vmatpush1.bf16.msra.mxu0 %v302
  %385 = vmatprep.subr.bf16.mxu0 0
  %386 = vmatpush1.bf16.msra.mxu0 %v303
  %387 = vmatprep.subr.bf16.mxu0 0
  %388 = vmatpush1.bf16.msra.mxu0 %v304
  %389 = vmatprep.subr.bf16.mxu0 0
  %390 = vmatpush1.bf16.msra.mxu0 %v305
  %391 = vmatprep.subr.bf16.mxu0 0
  %392 = vmatpush1.bf16.msra.mxu0 %v306
  %393 = vmatprep.subr.bf16.mxu0 0
  %394 = vmatpush1.bf16.msra.mxu0 %v307
  %395 = vmatprep.subr.bf16.mxu0 0
  %396 = vmatpush1.bf16.msra.mxu0 %v308
  %397 = vmatprep.subr.bf16.mxu0 0
  %398 = vmatpush1.bf16.msra.mxu0 %v309
  %399 = vmatprep.subr.bf16.mxu0 0
  %400 = vmatpush1.bf16.msra.mxu0 %v310
  %401 = vmatprep.subr.bf16.mxu0 0
  %402 = vmatpush1.bf16.msra.mxu0 %v311
  %403 = vmatprep.subr.bf16.mxu0 0
  %404 = vmatpush1.bf16.msra.mxu0 %v312
  %405 = vmatprep.subr.bf16.mxu0 0
  %406 = vmatpush1.bf16.msra.mxu0 %v313
  %407 = vmatprep.subr.bf16.mxu0 0
  %408 = vmatpush1.bf16.msra.mxu0 %v314
  %409 = vmatprep.subr.bf16.mxu0 0
  %410 = vmatpush1.bf16.msra.mxu0 %v315
  %411 = vmatprep.mubr.bf16.mxu0 %v139
  %412 = vmatmul.mubr.bf16.gmra.mrb[0].mxu0 %v138
  %v413 = vpop.f32.mrb[0].mxu0
  %v414 = vadd.f32 %v104, %v413
  %v415 = vpop.f32.mrb[0].mxu0
  %v416 = vpop.f32.mrb[0].mxu0
  %v417 = vadd.f32 %v104, %v416
  %v418 = vpop.f32.mrb[0].mxu0
  %419 = vmatprep.mubr.bf16.mxu0 %v144
  %420 = vmatmul.mubr.bf16.gmra.mrb[0].mxu0 %v143
  %v421 = vpop.f32.mrb[0].mxu0
  %v422 = vadd.f32 %v104, %v421
  %v423 = vpop.f32.mrb[0].mxu0
  %v424 = vpop.f32.mrb[0].mxu0
  %v425 = vadd.f32 %v104, %v424
  %v426 = vpop.f32.mrb[0].mxu0
  %427 = vdwg.mxu0
  %428 = vmatprep.subr.bf16.mxu0 0
  %429 = vmatpush1.bf16.msra.mxu0 %v316
  %430 = vmatprep.subr.bf16.mxu0 0
  %431 = vmatpush1.bf16.msra.mxu0 %v317
  %432 = vmatprep.subr.bf16.mxu0 0
  %433 = vmatpush1.bf16.msra.mxu0 %v318
  %434 = vmatprep.subr.bf16.mxu0 0
  %435 = vmatpush1.bf16.msra.mxu0 %v319
  %436 = vmatprep.subr.bf16.mxu0 0
  %437 = vmatpush1.bf16.msra.mxu0 %v320
  %438 = vmatprep.subr.bf16.mxu0 0
  %439 = vmatpush1.bf16.msra.mxu0 %v321
  %440 = vmatprep.subr.bf16.mxu0 0
  %441 = vmatpush1.bf16.msra.mxu0 %v322
  %442 = vmatprep.subr.bf16.mxu0 0
  %443 = vmatpush1.bf16.msra.mxu0 %v323
  %444 = vmatprep.subr.bf16.mxu0 0
  %445 = vmatpush1.bf16.msra.mxu0 %v324
  %446 = vmatprep.subr.bf16.mxu0 0
  %447 = vmatpush1.bf16.msra.mxu0 %v325
  %448 = vmatprep.subr.bf16.mxu0 0
  %449 = vmatpush1.bf16.msra.mxu0 %v326
  %450 = vmatprep.subr.bf16.mxu0 0
  %451 = vmatpush1.bf16.msra.mxu0 %v327
  %452 = vmatprep.subr.bf16.mxu0 0
  %453 = vmatpush1.bf16.msra.mxu0 %v328
  %454 = vmatprep.subr.bf16.mxu0 0
  %455 = vmatpush1.bf16.msra.mxu0 %v329
  %456 = vmatprep.subr.bf16.mxu0 0
  %457 = vmatpush1.bf16.msra.mxu0 %v330
  %458 = vmatprep.subr.bf16.mxu0 0
  %459 = vmatpush1.bf16.msra.mxu0 %v331
  %460 = vmatprep.mubr.bf16.mxu0 %v141
  %461 = vmatmul.mubr.bf16.gmra.mrb[0].mxu0 %v140
  %v462 = vpop.f32.mrb[0].mxu0
  %v463 = vadd.f32 %v414, %v462
  %v464 = vpop.f32.mrb[0].mxu0
  %v465 = vpop.f32.mrb[0].mxu0
  %v466 = vadd.f32 %v417, %v465
  %v467 = vpop.f32.mrb[0].mxu0
  %468 = vmatprep.mubr.bf16.mxu0 %v146
  %469 = vmatmul.mubr.bf16.gmra.mrb[0].mxu0 %v145
  %v470 = vpop.f32.mrb[0].mxu0
  %v471 = vadd.f32 %v422, %v470
  %v472 = vpop.f32.mrb[0].mxu0
  %v473 = vpop.f32.mrb[0].mxu0
  %v474 = vadd.f32 %v425, %v473
  %v475 = vpop.f32.mrb[0].mxu0
  %476 = vdwg.mxu0
  %477 = vmatprep.subr.bf16.mxu0 0
  %478 = vmatpush1.bf16.msra.mxu0 %v332
  %479 = vmatprep.subr.bf16.mxu0 0
  %480 = vmatpush1.bf16.msra.mxu0 %v333
  %481 = vmatprep.subr.bf16.mxu0 0
  %482 = vmatpush1.bf16.msra.mxu0 %v334
  %483 = vmatprep.subr.bf16.mxu0 0
  %484 = vmatpush1.bf16.msra.mxu0 %v335
  %485 = vmatprep.subr.bf16.mxu0 0
  %486 = vmatpush1.bf16.msra.mxu0 0
  %487 = vmatprep.subr.bf16.mxu0 0
  %488 = vmatpush1.bf16.msra.mxu0 0
  %489 = vmatprep.subr.bf16.mxu0 0
  %490 = vmatpush1.bf16.msra.mxu0 0
  %491 = vmatprep.subr.bf16.mxu0 0
  %492 = vmatpush1.bf16.msra.mxu0 0
  %493 = vmatprep.subr.bf16.mxu0 0
  %494 = vmatpush1.bf16.msra.mxu0 0
  %495 = vmatprep.subr.bf16.mxu0 0
  %496 = vmatpush1.bf16.msra.mxu0 0
  %497 = vmatprep.subr.bf16.mxu0 0
  %498 = vmatpush1.bf16.msra.mxu0 0
  %499 = vmatprep.subr.bf16.mxu0 0
  %500 = vmatpush1.bf16.msra.mxu0 0
  %501 = vmatprep.subr.bf16.mxu0 0
  %502 = vmatpush1.bf16.msra.mxu0 0
  %503 = vmatprep.subr.bf16.mxu0 0
  %504 = vmatpush1.bf16.msra.mxu0 0
  %505 = vmatprep.subr.bf16.mxu0 0
  %506 = vmatpush1.bf16.msra.mxu0 0
  %507 = vmatprep.subr.bf16.mxu0 0
  %508 = vmatpush1.bf16.msra.mxu0 0
  %509 = vmatprep.mubr.bf16.mxu0 0
  %510 = vmatmul.mubr.bf16.gmra.mrb[0].mxu0 %v374
  %v511 = vpop.f32.mrb[0].mxu0
  %v512 = vadd.f32 %v463, %v511
  %v513 = vpop.f32.mrb[0].mxu0
  %v514 = vpop.f32.mrb[0].mxu0
  %v515 = vadd.f32 %v466, %v514
  %v516 = vpop.f32.mrb[0].mxu0
  %517 = vmatprep.mubr.bf16.mxu0 0
  %518 = vmatmul.mubr.bf16.gmra.mrb[0].mxu0 %v377
  %v519 = vpop.f32.mrb[0].mxu0
  %v520 = vadd.f32 %v471, %v519
  %v521 = vpop.f32.mrb[0].mxu0
  %v522 = vpop.f32.mrb[0].mxu0
  %v523 = vadd.f32 %v474, %v522
  %v524 = vpop.f32.mrb[0].mxu0
  %525 = vdwg.mxu0
  %v526 = vmax.f32 %v512, 0.0
  %v527 = vmax.f32 %v515, 0.0
  %v528 = vmax.f32 %v520, 0.0
  %v529 = vmax.f32 %v523, 0.0
  %530 = vst [vmem:[%s3] sm:$0xff] %v526
  %531 = vst [vmem:[%s3 + $0x8] sm:$0xff] %v527
  %532 = vst [vmem:[%s3 + $0x10] sm:$0xff] %v528
  %533 = vst [vmem:[%s3 + $0x18] sm:$0xff] %v529
  // Predicated region
  $region14: #{thermal_forward.15} parent=0 // pred_check
    _
  $region15: #{thermal_forward.15} parent=0 // pred_check_branch
    %535 = sbr.rel (0) target = $region17
  $region16: #{thermal_forward.15} parent=0 // pred_region
    _
  $region17: #{thermal_forward.15} parent=0 // pred_fallthru
    _
  // Predicated region
  $region18: #{thermal_forward.15} parent=0 // pred_check
    _
  $region19: #{thermal_forward.15} parent=0 // pred_check_branch
    %537 = sbr.rel (0) target = $region21
  $region20: #{thermal_forward.15} parent=0 // pred_region
    _
  $region21: #{thermal_forward.15} parent=0 // pred_fallthru
    _

// kernel: thermal_forward.18
$region0: #{thermal_forward.18}
  #allocation0 [shape = 'u32[]', space=smem, size = 0x4, offset = 0x4, fixed_abs, tag = 'smem constant byte address 0x4 - core index']
  #allocation1 [shape = 'u32[144,128]{1,0:T(1,128)}', space=vmem, size = 0x12000, scoped, tag = 'internal scratch']
  %s0 = inlined_call_operand.vmem [shape: bf16[32,256], index: 0, kind: input, shape index: {}]
  %s1 = inlined_call_operand.vmem [shape: bf16[256,128], index: 1, kind: input, shape index: {}]
  %s2 = inlined_call_operand.vmem [shape: f32[1,128], index: 2, kind: input, shape index: {}]
  %s3 = inlined_call_operand.vmem [shape: f32[32,128], index: 3, kind: output, shape index: {}]
  %s4 = sld [smem:[#allocation0]]
  $region22: #{thermal_forward.18} parent=0
    _
  %s6 = ssub.s32 1, %s4
  %s7 = scalar_select 0, %s6, %s4
  // Predicated region
  $region2: #{thermal_forward.18} parent=0 // pred_check
    _
  $region3: #{thermal_forward.18} parent=0 // pred_check_branch
    %9 = sbr.rel (0) target = $region5
  $region4: #{thermal_forward.18} parent=0 // pred_region
    _
  $region5: #{thermal_forward.18} parent=0 // pred_fallthru
    _
  // Predicated region
  $region6: #{thermal_forward.18} parent=0 // pred_check
    _
  $region7: #{thermal_forward.18} parent=0 // pred_check_branch
    %11 = sbr.rel (0) target = $region9
  $region8: #{thermal_forward.18} parent=0 // pred_region
    _
  $region9: #{thermal_forward.18} parent=0 // pred_fallthru
    _
  // Predicated region
  $region10: #{thermal_forward.18} parent=0 // pred_check
    _
  $region11: #{thermal_forward.18} parent=0 // pred_check_branch
    %13 = sbr.rel (0) target = $region13
  $region12: #{thermal_forward.18} parent=0 // pred_region
    _
  $region13: #{thermal_forward.18} parent=0 // pred_fallthru
    _
  %v15 = vld [vmem:[%s0] sm:$0xff]
  %v16 = vld [vmem:[%s0 + $0x8] sm:$0xff]
  %v17 = vld [vmem:[%s0 + $0x10] sm:$0xff]
  %v18 = vld [vmem:[%s0 + $0x18] sm:$0xff]
  %v19 = vld [vmem:[%s1] sm:$0xf]
  %v20 = vld [vmem:[%s1 + $0x4] sm:$0xf]
  %v21 = vld [vmem:[%s1 + $0x8] sm:$0xf]
  %v22 = vld [vmem:[%s1 + $0xc] sm:$0xf]
  %v23 = vld [vmem:[%s1 + $0x10] sm:$0xf]
  %v24 = vld [vmem:[%s1 + $0x14] sm:$0xf]
  %v25 = vld [vmem:[%s1 + $0x18] sm:$0xf]
  %v26 = vld [vmem:[%s1 + $0x1c] sm:$0xf]
  %v27 = vld [vmem:[%s1 + $0x20] sm:$0xf]
  %v28 = vld [vmem:[%s1 + $0x24] sm:$0xf]
  %v29 = vld [vmem:[%s1 + $0x28] sm:$0xf]
  %v30 = vld [vmem:[%s1 + $0x2c] sm:$0xf]
  %v31 = vld [vmem:[%s1 + $0x30] sm:$0xf]
  %v32 = vld [vmem:[%s1 + $0x34] sm:$0xf]
  %v33 = vld [vmem:[%s1 + $0x38] sm:$0xf]
  %v34 = vld [vmem:[%s1 + $0x3c] sm:$0xf]
  %v35 = vld [vmem:[%s1 + $0x40] sm:$0xf]
  %v36 = vld [vmem:[%s1 + $0x44] sm:$0xf]
  %v37 = vld [vmem:[%s1 + $0x48] sm:$0xf]
  %v38 = vld [vmem:[%s1 + $0x4c] sm:$0xf]
  %v39 = vld [vmem:[%s1 + $0x50] sm:$0xf]
  %v40 = vld [vmem:[%s1 + $0x54] sm:$0xf]
  %v41 = vld [vmem:[%s1 + $0x58] sm:$0xf]
  %v42 = vld [vmem:[%s1 + $0x5c] sm:$0xf]
  %v43 = vld [vmem:[%s1 + $0x60] sm:$0xf]
  %v44 = vld [vmem:[%s1 + $0x64] sm:$0xf]
  %v45 = vld [vmem:[%s1 + $0x68] sm:$0xf]
  %v46 = vld [vmem:[%s1 + $0x6c] sm:$0xf]
  %v47 = vld [vmem:[%s1 + $0x70] sm:$0xf]
  %v48 = vld [vmem:[%s1 + $0x74] sm:$0xf]
  %v49 = vld [vmem:[%s1 + $0x78] sm:$0xf]
  %v50 = vld [vmem:[%s1 + $0x7c] sm:$0xf]
  %v51 = vld [vmem:[%s2] sm:$0x1]
  %v53 = vlaneseq
  %v54 = vshrl.u32 %v53, 7
  %v55 = vsub.s32 0, %v54
  %v56 = vrot.slane %v51, %v55
  %v62 = vunpack.c.l.b16 %v15
  %v63 = vunpack.c.h.b16 %v15
  %v64 = vunpack.c.l.b16 %v16
  %v65 = vunpack.c.h.b16 %v16
  %v66 = vunpack.c.l.b16 %v17
  %v67 = vunpack.c.h.b16 %v17
  %v68 = vunpack.c.l.b16 %v18
  %v69 = vunpack.c.h.b16 %v18
  %v70 = vpack.c.b16 %v64, %v62
  %v71 = vpack.c.b16 %v65, %v63
  %v72 = vpack.c.b16 %v68, %v66
  %v73 = vpack.c.b16 %v69, %v67
  %v110 = vunpack.c.l.b16 %v19
  %v111 = vunpack.c.l.b16 %v20
  %v112 = vunpack.c.l.b16 %v21
  %v113 = vunpack.c.l.b16 %v22
  %v114 = vunpack.c.l.b16 %v23
  %v115 = vunpack.c.l.b16 %v24
  %v116 = vunpack.c.l.b16 %v25
  %v117 = vunpack.c.l.b16 %v26
  %v118 = vunpack.c.l.b16 %v27
  %v119 = vunpack.c.l.b16 %v28
  %v120 = vunpack.c.l.b16 %v29
  %v121 = vunpack.c.l.b16 %v30
  %v122 = vunpack.c.l.b16 %v31
  %v123 = vunpack.c.l.b16 %v32
  %v124 = vunpack.c.l.b16 %v33
  %v125 = vunpack.c.l.b16 %v34
  %v126 = vunpack.c.l.b16 %v35
  %v127 = vunpack.c.l.b16 %v36
  %v128 = vunpack.c.l.b16 %v37
  %v129 = vunpack.c.l.b16 %v38
  %v130 = vunpack.c.l.b16 %v39
  %v131 = vunpack.c.l.b16 %v40
  %v132 = vunpack.c.l.b16 %v41
  %v133 = vunpack.c.l.b16 %v42
  %v134 = vunpack.c.l.b16 %v43
  %v135 = vunpack.c.l.b16 %v44
  %v136 = vunpack.c.l.b16 %v45
  %v137 = vunpack.c.l.b16 %v46
  %v138 = vunpack.c.l.b16 %v47
  %v139 = vunpack.c.l.b16 %v48
  %v140 = vunpack.c.l.b16 %v49
  %v141 = vunpack.c.l.b16 %v50
  %v142 = vpack.c.b16 %v111, %v110
  %v143 = vpack.c.b16 %v113, %v112
  %v144 = vpack.c.b16 %v115, %v114
  %v145 = vpack.c.b16 %v117, %v116
  %v146 = vpack.c.b16 %v119, %v118
  %v147 = vpack.c.b16 %v121, %v120
  %v148 = vpack.c.b16 %v123, %v122
  %v149 = vpack.c.b16 %v125, %v124
  %v150 = vpack.c.b16 %v127, %v126
  %v151 = vpack.c.b16 %v129, %v128
  %v152 = vpack.c.b16 %v131, %v130
  %v153 = vpack.c.b16 %v133, %v132
  %v154 = vpack.c.b16 %v135, %v134
  %v155 = vpack.c.b16 %v137, %v136
  %v156 = vpack.c.b16 %v139, %v138
  %v157 = vpack.c.b16 %v141, %v140
  %174 = vmatprep.subr.bf16.mxu0 0
  %175 = vmatpush1.bf16.msra.mxu0 %v142
  %176 = vmatprep.subr.bf16.mxu0 0
  %177 = vmatpush1.bf16.msra.mxu0 %v143
  %178 = vmatprep.subr.bf16.mxu0 0
  %179 = vmatpush1.bf16.msra.mxu0 %v144
  %180 = vmatprep.subr.bf16.mxu0 0
  %181 = vmatpush1.bf16.msra.mxu0 %v145
  %182 = vmatprep.subr.bf16.mxu0 0
  %183 = vmatpush1.bf16.msra.mxu0 %v146
  %184 = vmatprep.subr.bf16.mxu0 0
  %185 = vmatpush1.bf16.msra.mxu0 %v147
  %186 = vmatprep.subr.bf16.mxu0 0
  %187 = vmatpush1.bf16.msra.mxu0 %v148
  %188 = vmatprep.subr.bf16.mxu0 0
  %189 = vmatpush1.bf16.msra.mxu0 %v149
  %190 = vmatprep.subr.bf16.mxu0 0
  %191 = vmatpush1.bf16.msra.mxu0 %v150
  %192 = vmatprep.subr.bf16.mxu0 0
  %193 = vmatpush1.bf16.msra.mxu0 %v151
  %194 = vmatprep.subr.bf16.mxu0 0
  %195 = vmatpush1.bf16.msra.mxu0 %v152
  %196 = vmatprep.subr.bf16.mxu0 0
  %197 = vmatpush1.bf16.msra.mxu0 %v153
  %198 = vmatprep.subr.bf16.mxu0 0
  %199 = vmatpush1.bf16.msra.mxu0 %v154
  %200 = vmatprep.subr.bf16.mxu0 0
  %201 = vmatpush1.bf16.msra.mxu0 %v155
  %202 = vmatprep.subr.bf16.mxu0 0
  %203 = vmatpush1.bf16.msra.mxu0 %v156
  %204 = vmatprep.subr.bf16.mxu0 0
  %205 = vmatpush1.bf16.msra.mxu0 %v157
  %206 = vmatprep.mubr.bf16.mxu0 %v71
  %207 = vmatmul.mubr.bf16.gmra.mrb[0].mxu0 %v70
  %v208 = vpop.f32.mrb[0].mxu0
  %v209 = vadd.f32 %v56, %v208
  %v210 = vpop.f32.mrb[0].mxu0
  %v211 = vpop.f32.mrb[0].mxu0
  %v212 = vadd.f32 %v56, %v211
  %v213 = vpop.f32.mrb[0].mxu0
  %214 = vmatprep.mubr.bf16.mxu0 %v73
  %215 = vmatmul.mubr.bf16.gmra.mrb[0].mxu0 %v72
  %v216 = vpop.f32.mrb[0].mxu0
  %v217 = vadd.f32 %v56, %v216
  %v218 = vpop.f32.mrb[0].mxu0
  %v219 = vpop.f32.mrb[0].mxu0
  %v220 = vadd.f32 %v56, %v219
  %v221 = vpop.f32.mrb[0].mxu0
  %222 = vdwg.mxu0
  %v223 = vmax.f32 %v209, 0.0
  %v224 = vmax.f32 %v212, 0.0
  %v225 = vmax.f32 %v217, 0.0
  %v226 = vmax.f32 %v220, 0.0
  %227 = vst [vmem:[%s3] sm:$0xff] %v223
  %228 = vst [vmem:[%s3 + $0x8] sm:$0xff] %v224
  %229 = vst [vmem:[%s3 + $0x10] sm:$0xff] %v225
  %230 = vst [vmem:[%s3 + $0x18] sm:$0xff] %v226
  // Predicated region
  $region14: #{thermal_forward.18} parent=0 // pred_check
    _
  $region15: #{thermal_forward.18} parent=0 // pred_check_branch
    %232 = sbr.rel (0) target = $region17
  $region16: #{thermal_forward.18} parent=0 // pred_region
    _
  $region17: #{thermal_forward.18} parent=0 // pred_fallthru
    _
  // Predicated region
  $region18: #{thermal_forward.18} parent=0 // pred_check
    _
  $region19: #{thermal_forward.18} parent=0 // pred_check_branch
    %234 = sbr.rel (0) target = $region21
  $region20: #{thermal_forward.18} parent=0 // pred_region
    _
  $region21: #{thermal_forward.18} parent=0 // pred_fallthru
    _

</llo_original>
